<compile_context>
chip_gen: v5e
topology: v5e:2x2
jax: 0.10.0
libtpu: 0.0.40
codegen_flags: <defaults>
</compile_context>

<pallas_src>
import functools

import jax
import jax.numpy as jnp
from jax.experimental import pallas as pl
from jax.experimental.pallas import tpu as pltpu


# ---------------------------------------------------------------------------
# Fused Pallas kernel: all LSTM layers + FC + LeakyReLU in one invocation
# ---------------------------------------------------------------------------
def _lstm_net_kernel(num_layers, seq_len, *refs):
    """Fused multi-layer LSTM + Linear + LeakyReLU.  Runs once (grid=()).

    Ref layout (L = num_layers, Bp = sublane-padded batch):
      inputs : x       (T*Bp, I)   time-major flattened (row t*Bp + b), f32
               h0      (L, Bp, H)  f32
               c0      (L, Bp, H)  f32
               per layer: wih_t (in_dim, 4H) f32, whh_t (H, 4H) bf16, bias (1, 4H) f32
               fc:        w_fc_t (H, O) f32,       b_fc (1, O) f32
      outputs: out (Bp, O), hT (L, Bp, H), cT (L, Bp, H)   all f32
    """
    L = num_layers
    T = seq_len
    x_ref, h0_ref, c0_ref = refs[:3]
    layer_refs = refs[3:3 + 3 * L]
    w_fc_ref, b_fc_ref = refs[3 + 3 * L:5 + 3 * L]
    out_ref, hT_ref, cT_ref = refs[5 + 3 * L:8 + 3 * L]

    _, B, H = h0_ref.shape            # B = padded batch (multiple of 8)

    # Lane-index mask selecting the g (cell-candidate) quarter of the (B, 4H) gate
    # vector, plus the tanh/sigmoid pre-scale.  Hoisted out of all loops
    # (JAX does not CSE broadcast_in_dim).
    lane = jax.lax.broadcasted_iota(jnp.int32, (B, 4 * H), 1)
    g_mask = (lane >= 2 * H) & (lane < 3 * H)
    pre_scale = jnp.where(g_mask, jnp.float32(1.0), jnp.float32(0.5))

    xs = x_ref[...]                   # (T*B, I) current layer input (register-resident)
    h = None
    for layer in range(L):
        wih_t = layer_refs[3 * layer][...]          # (in_dim, 4H) f32
        whh_t = layer_refs[3 * layer + 1][...]      # (H, 4H)     bf16 (pre-cast MXU operand)
        bias = layer_refs[3 * layer + 2][...]       # (1, 4H)     f32

        # Hoisted input projection: one MXU matmul over all T*B rows of this layer's input.
        gx = jnp.dot(xs, wih_t, preferred_element_type=jnp.float32) + bias   # (T*B, 4H)

        h = h0_ref[layer]                           # (B, H) f32
        c = c0_ref[layer]                           # (B, H) f32

        hs = []
        # Sequential recurrence; fully unrolled at trace time (T small & static).
        for t in range(T):
            # bf16 MXU operands, f32 accumulation (single-pass MXU on the serial path).
            rec = jnp.dot(h.astype(jnp.bfloat16), whh_t,
                          preferred_element_type=jnp.float32)                # (B, 4H)
            gates = gx[t * B:(t + 1) * B, :] + rec                           # aligned (8,128) slice
            # Single tanh over the full 128-lane vreg; sigmoid(x) = 0.5*tanh(x/2) + 0.5
            # recovered for the i/f/o quarters with a lane-index select.
            tt = jnp.tanh(gates * pre_scale)
            act = jnp.where(g_mask, tt, jnp.float32(0.5) * tt + jnp.float32(0.5))
            i_g = act[:, 0 * H:1 * H]
            f_g = act[:, 1 * H:2 * H]
            g_g = act[:, 2 * H:3 * H]
            o_g = act[:, 3 * H:4 * H]
            c = f_g * c + i_g * g_g
            h = o_g * jnp.tanh(c)
            if layer + 1 < L:
                hs.append(h)                        # stays in registers

        hT_ref[layer] = h
        cT_ref[layer] = c
        if layer + 1 < L:
            # Next layer's input, built at register level (no VMEM scratch roundtrip).
            xs = jnp.concatenate(hs, axis=0)        # (T*B, H), time-major

    # Final FC + LeakyReLU on the last timestep of the last layer (== x[:, -1, :]).
    y = jnp.dot(h, w_fc_ref[...], preferred_element_type=jnp.float32) + b_fc_ref[...]
    out_ref[...] = jnp.where(y >= 0, y, jnp.float32(0.01) * y)


# ---------------------------------------------------------------------------
# Wrapper (weights arrive pre-transposed / pre-combined from __init__)
# ---------------------------------------------------------------------------
@jax.jit
def lstm_net_forward(kparams, x, hidden):
    """x: (B, T, input_size) batch_first; hidden: list of (h0 (1,B,H), c0 (1,B,H)).

    Returns (out (B, output_size), new_hidden) with the same structure as `hidden`.
    """
    lstm_layers = kparams["lstm"]
    L = len(lstm_layers)
    B, T, I = x.shape
    H = lstm_layers[0]["w_hh_t"].shape[0]
    O = kparams["fc"]["w_t"].shape[1]
    Bp = max(8, -(-B // 8) * 8)                     # sublane-pad batch to a multiple of 8

    # Time-major, batch-padded, flattened: row t*Bp + b  <->  (time t, batch b).
    x_tm = jnp.transpose(x, (1, 0, 2))                               # (T, B, I)
    x_tm = jnp.pad(x_tm, ((0, 0), (0, Bp - B), (0, 0)))              # (T, Bp, I)
    x_flat = x_tm.reshape(T * Bp, I)

    h0_all = jnp.concatenate([h for (h, _) in hidden], axis=0)       # (L, B, H)
    c0_all = jnp.concatenate([c for (_, c) in hidden], axis=0)       # (L, B, H)
    h0_all = jnp.pad(h0_all, ((0, 0), (0, Bp - B), (0, 0)))          # pad rows are zero
    c0_all = jnp.pad(c0_all, ((0, 0), (0, Bp - B), (0, 0)))

    inputs = [x_flat, h0_all, c0_all]
    in_specs = [
        pl.BlockSpec((T * Bp, I), lambda: (0, 0)),
        pl.BlockSpec((L, Bp, H), lambda: (0, 0, 0)),
        pl.BlockSpec((L, Bp, H), lambda: (0, 0, 0)),
    ]
    for li, layer in enumerate(lstm_layers):
        in_dim = I if li == 0 else H
        inputs += [layer["w_ih_t"], layer["w_hh_t"], layer["bias"]]
        in_specs += [
            pl.BlockSpec((in_dim, 4 * H), lambda: (0, 0)),
            pl.BlockSpec((H, 4 * H), lambda: (0, 0)),
            pl.BlockSpec((1, 4 * H), lambda: (0, 0)),
        ]
    inputs += [kparams["fc"]["w_t"], kparams["fc"]["b"]]
    in_specs += [
        pl.BlockSpec((H, O), lambda: (0, 0)),
        pl.BlockSpec((1, O), lambda: (0, 0)),
    ]

    out, hT, cT = pl.pallas_call(
        functools.partial(_lstm_net_kernel, L, T),
        out_shape=(
            jax.ShapeDtypeStruct((Bp, O), jnp.float32),
            jax.ShapeDtypeStruct((L, Bp, H), jnp.float32),
            jax.ShapeDtypeStruct((L, Bp, H), jnp.float32),
        ),
        grid_spec=pltpu.PrefetchScalarGridSpec(
            num_scalar_prefetch=0,
            grid=(),
            in_specs=in_specs,
            out_specs=[
                pl.BlockSpec((Bp, O), lambda: (0, 0)),
                pl.BlockSpec((L, Bp, H), lambda: (0, 0, 0)),
                pl.BlockSpec((L, Bp, H), lambda: (0, 0, 0)),
            ],
        ),
    )(*inputs)

    # Drop batch padding; per-layer static slices keep the (1, B, H) hidden structure.
    out = out[:B]
    hT = hT[:, :B]
    cT = cT[:, :B]
    new_hidden = [(hT[i:i + 1], cT[i:i + 1]) for i in range(L)]
    return out, new_hidden


# ---------------------------------------------------------------------------
# LSTMNet (JAX/Pallas version of the PyTorch module)
# ---------------------------------------------------------------------------
class LSTMNet:
    def __init__(self, input_size, hidden_size, output_size, num_layers,
                 dropout=0.3, key=None):
        # dropout has no forward-pass effect: each stacked nn.LSTM has num_layers=1,
        # so PyTorch ignores its dropout argument.
        self.input_size = input_size
        self.hidden_size = hidden_size
        self.output_size = output_size
        self.num_layers = num_layers

        if key is None:
            key = jax.random.PRNGKey(0)
        H = hidden_size
        scale = 1.0 / float(H) ** 0.5
        lstm = []
        for i in range(num_layers):
            in_dim = input_size if i == 0 else hidden_size
            key, k1, k2, k3, k4 = jax.random.split(key, 5)
            lstm.append({
                "w_ih": jax.random.uniform(k1, (4 * H, in_dim), jnp.float32, -scale, scale),
                "w_hh": jax.random.uniform(k2, (4 * H, H), jnp.float32, -scale, scale),
                "b_ih": jax.random.uniform(k3, (4 * H,), jnp.float32, -scale, scale),
                "b_hh": jax.random.uniform(k4, (4 * H,), jnp.float32, -scale, scale),
            })
        key, k1, k2 = jax.random.split(key, 3)
        fc = {
            "w": jax.random.uniform(k1, (output_size, H), jnp.float32, -scale, scale),
            "b": jax.random.uniform(k2, (output_size,), jnp.float32, -scale, scale),
        }
        self.params = {"lstm": lstm, "fc": fc}   # original PyTorch layout (reference / export)

        # Kernel-layout weights, preprocessed ONCE here (hoisted out of the per-call jit):
        #   w_ih^T, w_hh^T (bf16 MXU operand), combined bias, fc.w^T, 2D fc bias.
        self.kernel_params = {
            "lstm": [
                {
                    "w_ih_t": jnp.transpose(layer["w_ih"]),                         # (in_dim, 4H) f32
                    "w_hh_t": jnp.transpose(layer["w_hh"]).astype(jnp.bfloat16),    # (H, 4H) bf16
                    "bias": (layer["b_ih"] + layer["b_hh"]).reshape(1, 4 * H),      # (1, 4H) f32
                }
                for layer in lstm
            ],
            "fc": {
                "w_t": jnp.transpose(fc["w"]),                                      # (H, O) f32
                "b": fc["b"].reshape(1, output_size),                               # (1, O) f32
            },
        }

    def init_hidden(self, batch_size):
        H = self.hidden_size
        return [(jnp.zeros((1, batch_size, H), jnp.float32),
                 jnp.zeros((1, batch_size, H), jnp.float32))
                for _ in range(self.num_layers)]

    def forward(self, x, hidden):
        return lstm_net_forward(self.kernel_params, x, hidden)


# ---------------------------------------------------------------------------
# Pure-JAX reference (for correctness check; f32 HIGHEST precision throughout)
# ---------------------------------------------------------------------------
def _reference_forward(params, x, hidden):
    dot = functools.partial(jnp.dot, precision=jax.lax.Precision.HIGHEST)
    B, T, _ = x.shape
    seq = x
    new_hidden = []
    for i, layer in enumerate(params["lstm"]):
        H = layer["w_hh"].shape[1]
        h, c = hidden[i][0][0], hidden[i][1][0]
        b = layer["b_ih"] + layer["b_hh"]
        ys = []
        for t in range(T):
            gates = dot(seq[:, t, :], layer["w_ih"].T) + dot(h, layer["w_hh"].T) + b
            i_g = jax.nn.sigmoid(gates[:, 0:H])
            f_g = jax.nn.sigmoid(gates[:, H:2 * H])
            g_g = jnp.tanh(gates[:, 2 * H:3 * H])
            o_g = jax.nn.sigmoid(gates[:, 3 * H:4 * H])
            c = f_g * c + i_g * g_g
            h = o_g * jnp.tanh(c)
            ys.append(h)
        seq = jnp.stack(ys, axis=1)
        new_hidden.append((h[None], c[None]))
    y = dot(seq[:, -1, :], params["fc"]["w"].T) + params["fc"]["b"]
    return jnp.where(y >= 0, y, 0.01 * y), new_hidden


# ---------------------------------------------------------------------------
if __name__ == "__main__":
    input_size, hidden_size, output_size, num_layers = 16, 32, 4, 2
    batch, seq_len = 2, 8

    root = jax.random.PRNGKey(0)
    k_params, k_x = jax.random.split(root)

    net = LSTMNet(input_size, hidden_size, output_size, num_layers, key=k_params)
    x = jax.random.normal(k_x, (batch, seq_len, input_size), dtype=jnp.float32)
    hidden = net.init_hidden(batch)

    out, new_hidden = net.forward(x, hidden)
    out = jax.block_until_ready(out)
    jax.block_until_ready(new_hidden)

    assert out.shape == (batch, output_size)
    assert len(new_hidden) == num_layers
    assert new_hidden[0][0].shape == (1, batch, hidden_size)
    assert new_hidden[0][1].shape == (1, batch, hidden_size)

    # Numerical check against a pure-JAX f32 reference.  Tolerance is 2e-2 because the
    # recurrent matmul intentionally uses bf16 MXU operands (f32 accumulation); the
    # cell-state rounding error compounds over T*L steps but stays well below this bound.
    ref_out, ref_hidden = _reference_forward(net.params, x, hidden)
    assert jnp.allclose(out, ref_out, atol=2e-2, rtol=2e-2), "output mismatch vs reference"
    for (h_k, c_k), (h_r, c_r) in zip(new_hidden, ref_hidden):
        assert jnp.allclose(h_k, h_r, atol=2e-2, rtol=2e-2), "hT mismatch vs reference"
        assert jnp.allclose(c_k, c_r, atol=2e-2, rtol=2e-2), "cT mismatch vs reference"

    print("KERNEL_OK")
</pallas_src>

<mosaic_0001>
module attributes {stable_mosaic.version = 11 : i64} {
  func.func @_lstm_net_kernel(%arg0: memref<64x16xf32, #tpu.memory_space<vmem>>, %arg1: memref<2x8x32xf32, #tpu.memory_space<vmem>>, %arg2: memref<2x8x32xf32, #tpu.memory_space<vmem>>, %arg3: memref<16x128xf32, #tpu.memory_space<vmem>>, %arg4: memref<32x128xbf16, #tpu.memory_space<vmem>>, %arg5: memref<1x128xf32, #tpu.memory_space<vmem>>, %arg6: memref<32x128xf32, #tpu.memory_space<vmem>>, %arg7: memref<32x128xbf16, #tpu.memory_space<vmem>>, %arg8: memref<1x128xf32, #tpu.memory_space<vmem>>, %arg9: memref<32x4xf32, #tpu.memory_space<vmem>>, %arg10: memref<1x4xf32, #tpu.memory_space<vmem>>, %arg11: memref<8x4xf32, #tpu.memory_space<vmem>>, %arg12: memref<2x8x32xf32, #tpu.memory_space<vmem>>, %arg13: memref<2x8x32xf32, #tpu.memory_space<vmem>>) attributes {dimension_semantics = [], scalar_prefetch = 0 : i64, scratch_operands = 0 : i64, tpu.core_type = #tpu.core_type<tc>} {
    %0 = tpu.iota {dimensions = array<i32: 1>} : vector<8x128xi32>
    %c64_i32 = arith.constant 64 : i32
    %1 = vector.broadcast %c64_i32 : i32 to vector<8x128xi32>
    %2 = arith.cmpi sge, %0, %1 : vector<8x128xi32>
    %c96_i32 = arith.constant 96 : i32
    %3 = vector.broadcast %c96_i32 : i32 to vector<8x128xi32>
    %4 = arith.cmpi slt, %0, %3 : vector<8x128xi32>
    %5 = arith.andi %2, %4 : vector<8x128xi1>
    %cst = arith.constant 1.000000e+00 : f32
    %cst_0 = arith.constant 5.000000e-01 : f32
    %6 = vector.broadcast %cst : f32 to vector<8x128xf32>
    %7 = vector.broadcast %cst_0 : f32 to vector<8x128xf32>
    %8 = arith.select %5, %6, %7 : vector<8x128xi1>, vector<8x128xf32>
    %c0 = arith.constant 0 : index
    %c0_1 = arith.constant 0 : index
    %9 = vector.load %arg0[%c0, %c0_1] : memref<64x16xf32, #tpu.memory_space<vmem>>, vector<64x16xf32>
    %c0_2 = arith.constant 0 : index
    %c0_3 = arith.constant 0 : index
    %10 = vector.load %arg3[%c0_2, %c0_3] : memref<16x128xf32, #tpu.memory_space<vmem>>, vector<16x128xf32>
    %c0_4 = arith.constant 0 : index
    %c0_5 = arith.constant 0 : index
    %11 = vector.load %arg4[%c0_4, %c0_5] : memref<32x128xbf16, #tpu.memory_space<vmem>>, vector<32x128xbf16>
    %c0_6 = arith.constant 0 : index
    %c0_7 = arith.constant 0 : index
    %12 = vector.load %arg5[%c0_6, %c0_7] : memref<1x128xf32, #tpu.memory_space<vmem>>, vector<1x128xf32>
    %cst_8 = arith.constant dense<0.000000e+00> : vector<64x128xf32>
    %13 = tpu.matmul %9, %10, %cst_8 {dimension_numbers = #tpu.dot_dimension_numbers<[1], [0], [0], [1], [0, 0, 1, 1], [], []>} : vector<64x16xf32>, vector<16x128xf32>, vector<64x128xf32> -> vector<64x128xf32>
    %14 = vector.broadcast %12 : vector<1x128xf32> to vector<64x128xf32>
    %15 = arith.addf %13, %14 : vector<64x128xf32>
    %c0_9 = arith.constant 0 : index
    %c0_10 = arith.constant 0 : index
    %c0_11 = arith.constant 0 : index
    %16 = vector.load %arg1[%c0_9, %c0_10, %c0_11] : memref<2x8x32xf32, #tpu.memory_space<vmem>>, vector<1x8x32xf32>
    %17 = vector.shape_cast %16 : vector<1x8x32xf32> to vector<8x32xf32>
    %c0_12 = arith.constant 0 : index
    %c0_13 = arith.constant 0 : index
    %c0_14 = arith.constant 0 : index
    %18 = vector.load %arg2[%c0_12, %c0_13, %c0_14] : memref<2x8x32xf32, #tpu.memory_space<vmem>>, vector<1x8x32xf32>
    %19 = vector.shape_cast %18 : vector<1x8x32xf32> to vector<8x32xf32>
    %20 = arith.truncf %17 : vector<8x32xf32> to vector<8x32xbf16>
    %cst_15 = arith.constant dense<0.000000e+00> : vector<8x128xf32>
    %21 = tpu.matmul %20, %11, %cst_15 {dimension_numbers = #tpu.dot_dimension_numbers<[1], [0], [0], [1], [0, 0, 1, 1], [], []>} : vector<8x32xbf16>, vector<32x128xbf16>, vector<8x128xf32> -> vector<8x128xf32>
    %22 = vector.extract_strided_slice %15 {offsets = [0, 0], sizes = [8, 128], strides = [1, 1]} : vector<64x128xf32> to vector<8x128xf32>
    %23 = arith.addf %22, %21 : vector<8x128xf32>
    %24 = arith.mulf %23, %8 : vector<8x128xf32>
    %25 = math.tanh %24 : vector<8x128xf32>
    %cst_16 = arith.constant 5.000000e-01 : f32
    %26 = vector.broadcast %cst_16 : f32 to vector<8x128xf32>
    %27 = arith.mulf %26, %25 : vector<8x128xf32>
    %cst_17 = arith.constant 5.000000e-01 : f32
    %28 = vector.broadcast %cst_17 : f32 to vector<8x128xf32>
    %29 = arith.addf %27, %28 : vector<8x128xf32>
    %30 = arith.select %5, %25, %29 : vector<8x128xi1>, vector<8x128xf32>
    %31 = vector.extract_strided_slice %30 {offsets = [0, 0], sizes = [8, 32], strides = [1, 1]} : vector<8x128xf32> to vector<8x32xf32>
    %32 = vector.extract_strided_slice %30 {offsets = [0, 32], sizes = [8, 32], strides = [1, 1]} : vector<8x128xf32> to vector<8x32xf32>
    %33 = vector.extract_strided_slice %30 {offsets = [0, 64], sizes = [8, 32], strides = [1, 1]} : vector<8x128xf32> to vector<8x32xf32>
    %34 = vector.extract_strided_slice %30 {offsets = [0, 96], sizes = [8, 32], strides = [1, 1]} : vector<8x128xf32> to vector<8x32xf32>
    %35 = arith.mulf %32, %19 : vector<8x32xf32>
    %36 = arith.mulf %31, %33 : vector<8x32xf32>
    %37 = arith.addf %35, %36 : vector<8x32xf32>
    %38 = math.tanh %37 : vector<8x32xf32>
    %39 = arith.mulf %34, %38 : vector<8x32xf32>
    %40 = arith.truncf %39 : vector<8x32xf32> to vector<8x32xbf16>
    %cst_18 = arith.constant dense<0.000000e+00> : vector<8x128xf32>
    %41 = tpu.matmul %40, %11, %cst_18 {dimension_numbers = #tpu.dot_dimension_numbers<[1], [0], [0], [1], [0, 0, 1, 1], [], []>} : vector<8x32xbf16>, vector<32x128xbf16>, vector<8x128xf32> -> vector<8x128xf32>
    %42 = vector.extract_strided_slice %15 {offsets = [8, 0], sizes = [8, 128], strides = [1, 1]} : vector<64x128xf32> to vector<8x128xf32>
    %43 = arith.addf %42, %41 : vector<8x128xf32>
    %44 = arith.mulf %43, %8 : vector<8x128xf32>
    %45 = math.tanh %44 : vector<8x128xf32>
    %cst_19 = arith.constant 5.000000e-01 : f32
    %46 = vector.broadcast %cst_19 : f32 to vector<8x128xf32>
    %47 = arith.mulf %46, %45 : vector<8x128xf32>
    %cst_20 = arith.constant 5.000000e-01 : f32
    %48 = vector.broadcast %cst_20 : f32 to vector<8x128xf32>
    %49 = arith.addf %47, %48 : vector<8x128xf32>
    %50 = arith.select %5, %45, %49 : vector<8x128xi1>, vector<8x128xf32>
    %51 = vector.extract_strided_slice %50 {offsets = [0, 0], sizes = [8, 32], strides = [1, 1]} : vector<8x128xf32> to vector<8x32xf32>
    %52 = vector.extract_strided_slice %50 {offsets = [0, 32], sizes = [8, 32], strides = [1, 1]} : vector<8x128xf32> to vector<8x32xf32>
    %53 = vector.extract_strided_slice %50 {offsets = [0, 64], sizes = [8, 32], strides = [1, 1]} : vector<8x128xf32> to vector<8x32xf32>
    %54 = vector.extract_strided_slice %50 {offsets = [0, 96], sizes = [8, 32], strides = [1, 1]} : vector<8x128xf32> to vector<8x32xf32>
    %55 = arith.mulf %52, %37 : vector<8x32xf32>
    %56 = arith.mulf %51, %53 : vector<8x32xf32>
    %57 = arith.addf %55, %56 : vector<8x32xf32>
    %58 = math.tanh %57 : vector<8x32xf32>
    %59 = arith.mulf %54, %58 : vector<8x32xf32>
    %60 = arith.truncf %59 : vector<8x32xf32> to vector<8x32xbf16>
    %cst_21 = arith.constant dense<0.000000e+00> : vector<8x128xf32>
    %61 = tpu.matmul %60, %11, %cst_21 {dimension_numbers = #tpu.dot_dimension_numbers<[1], [0], [0], [1], [0, 0, 1, 1], [], []>} : vector<8x32xbf16>, vector<32x128xbf16>, vector<8x128xf32> -> vector<8x128xf32>
    %62 = vector.extract_strided_slice %15 {offsets = [16, 0], sizes = [8, 128], strides = [1, 1]} : vector<64x128xf32> to vector<8x128xf32>
    %63 = arith.addf %62, %61 : vector<8x128xf32>
    %64 = arith.mulf %63, %8 : vector<8x128xf32>
    %65 = math.tanh %64 : vector<8x128xf32>
    %cst_22 = arith.constant 5.000000e-01 : f32
    %66 = vector.broadcast %cst_22 : f32 to vector<8x128xf32>
    %67 = arith.mulf %66, %65 : vector<8x128xf32>
    %cst_23 = arith.constant 5.000000e-01 : f32
    %68 = vector.broadcast %cst_23 : f32 to vector<8x128xf32>
    %69 = arith.addf %67, %68 : vector<8x128xf32>
    %70 = arith.select %5, %65, %69 : vector<8x128xi1>, vector<8x128xf32>
    %71 = vector.extract_strided_slice %70 {offsets = [0, 0], sizes = [8, 32], strides = [1, 1]} : vector<8x128xf32> to vector<8x32xf32>
    %72 = vector.extract_strided_slice %70 {offsets = [0, 32], sizes = [8, 32], strides = [1, 1]} : vector<8x128xf32> to vector<8x32xf32>
    %73 = vector.extract_strided_slice %70 {offsets = [0, 64], sizes = [8, 32], strides = [1, 1]} : vector<8x128xf32> to vector<8x32xf32>
    %74 = vector.extract_strided_slice %70 {offsets = [0, 96], sizes = [8, 32], strides = [1, 1]} : vector<8x128xf32> to vector<8x32xf32>
    %75 = arith.mulf %72, %57 : vector<8x32xf32>
    %76 = arith.mulf %71, %73 : vector<8x32xf32>
    %77 = arith.addf %75, %76 : vector<8x32xf32>
    %78 = math.tanh %77 : vector<8x32xf32>
    %79 = arith.mulf %74, %78 : vector<8x32xf32>
    %80 = arith.truncf %79 : vector<8x32xf32> to vector<8x32xbf16>
    %cst_24 = arith.constant dense<0.000000e+00> : vector<8x128xf32>
    %81 = tpu.matmul %80, %11, %cst_24 {dimension_numbers = #tpu.dot_dimension_numbers<[1], [0], [0], [1], [0, 0, 1, 1], [], []>} : vector<8x32xbf16>, vector<32x128xbf16>, vector<8x128xf32> -> vector<8x128xf32>
    %82 = vector.extract_strided_slice %15 {offsets = [24, 0], sizes = [8, 128], strides = [1, 1]} : vector<64x128xf32> to vector<8x128xf32>
    %83 = arith.addf %82, %81 : vector<8x128xf32>
    %84 = arith.mulf %83, %8 : vector<8x128xf32>
    %85 = math.tanh %84 : vector<8x128xf32>
    %cst_25 = arith.constant 5.000000e-01 : f32
    %86 = vector.broadcast %cst_25 : f32 to vector<8x128xf32>
    %87 = arith.mulf %86, %85 : vector<8x128xf32>
    %cst_26 = arith.constant 5.000000e-01 : f32
    %88 = vector.broadcast %cst_26 : f32 to vector<8x128xf32>
    %89 = arith.addf %87, %88 : vector<8x128xf32>
    %90 = arith.select %5, %85, %89 : vector<8x128xi1>, vector<8x128xf32>
    %91 = vector.extract_strided_slice %90 {offsets = [0, 0], sizes = [8, 32], strides = [1, 1]} : vector<8x128xf32> to vector<8x32xf32>
    %92 = vector.extract_strided_slice %90 {offsets = [0, 32], sizes = [8, 32], strides = [1, 1]} : vector<8x128xf32> to vector<8x32xf32>
    %93 = vector.extract_strided_slice %90 {offsets = [0, 64], sizes = [8, 32], strides = [1, 1]} : vector<8x128xf32> to vector<8x32xf32>
    %94 = vector.extract_strided_slice %90 {offsets = [0, 96], sizes = [8, 32], strides = [1, 1]} : vector<8x128xf32> to vector<8x32xf32>
    %95 = arith.mulf %92, %77 : vector<8x32xf32>
    %96 = arith.mulf %91, %93 : vector<8x32xf32>
    %97 = arith.addf %95, %96 : vector<8x32xf32>
    %98 = math.tanh %97 : vector<8x32xf32>
    %99 = arith.mulf %94, %98 : vector<8x32xf32>
    %100 = arith.truncf %99 : vector<8x32xf32> to vector<8x32xbf16>
    %cst_27 = arith.constant dense<0.000000e+00> : vector<8x128xf32>
    %101 = tpu.matmul %100, %11, %cst_27 {dimension_numbers = #tpu.dot_dimension_numbers<[1], [0], [0], [1], [0, 0, 1, 1], [], []>} : vector<8x32xbf16>, vector<32x128xbf16>, vector<8x128xf32> -> vector<8x128xf32>
    %102 = vector.extract_strided_slice %15 {offsets = [32, 0], sizes = [8, 128], strides = [1, 1]} : vector<64x128xf32> to vector<8x128xf32>
    %103 = arith.addf %102, %101 : vector<8x128xf32>
    %104 = arith.mulf %103, %8 : vector<8x128xf32>
    %105 = math.tanh %104 : vector<8x128xf32>
    %cst_28 = arith.constant 5.000000e-01 : f32
    %106 = vector.broadcast %cst_28 : f32 to vector<8x128xf32>
    %107 = arith.mulf %106, %105 : vector<8x128xf32>
    %cst_29 = arith.constant 5.000000e-01 : f32
    %108 = vector.broadcast %cst_29 : f32 to vector<8x128xf32>
    %109 = arith.addf %107, %108 : vector<8x128xf32>
    %110 = arith.select %5, %105, %109 : vector<8x128xi1>, vector<8x128xf32>
    %111 = vector.extract_strided_slice %110 {offsets = [0, 0], sizes = [8, 32], strides = [1, 1]} : vector<8x128xf32> to vector<8x32xf32>
    %112 = vector.extract_strided_slice %110 {offsets = [0, 32], sizes = [8, 32], strides = [1, 1]} : vector<8x128xf32> to vector<8x32xf32>
    %113 = vector.extract_strided_slice %110 {offsets = [0, 64], sizes = [8, 32], strides = [1, 1]} : vector<8x128xf32> to vector<8x32xf32>
    %114 = vector.extract_strided_slice %110 {offsets = [0, 96], sizes = [8, 32], strides = [1, 1]} : vector<8x128xf32> to vector<8x32xf32>
    %115 = arith.mulf %112, %97 : vector<8x32xf32>
    %116 = arith.mulf %111, %113 : vector<8x32xf32>
    %117 = arith.addf %115, %116 : vector<8x32xf32>
    %118 = math.tanh %117 : vector<8x32xf32>
    %119 = arith.mulf %114, %118 : vector<8x32xf32>
    %120 = arith.truncf %119 : vector<8x32xf32> to vector<8x32xbf16>
    %cst_30 = arith.constant dense<0.000000e+00> : vector<8x128xf32>
    %121 = tpu.matmul %120, %11, %cst_30 {dimension_numbers = #tpu.dot_dimension_numbers<[1], [0], [0], [1], [0, 0, 1, 1], [], []>} : vector<8x32xbf16>, vector<32x128xbf16>, vector<8x128xf32> -> vector<8x128xf32>
    %122 = vector.extract_strided_slice %15 {offsets = [40, 0], sizes = [8, 128], strides = [1, 1]} : vector<64x128xf32> to vector<8x128xf32>
    %123 = arith.addf %122, %121 : vector<8x128xf32>
    %124 = arith.mulf %123, %8 : vector<8x128xf32>
    %125 = math.tanh %124 : vector<8x128xf32>
    %cst_31 = arith.constant 5.000000e-01 : f32
    %126 = vector.broadcast %cst_31 : f32 to vector<8x128xf32>
    %127 = arith.mulf %126, %125 : vector<8x128xf32>
    %cst_32 = arith.constant 5.000000e-01 : f32
    %128 = vector.broadcast %cst_32 : f32 to vector<8x128xf32>
    %129 = arith.addf %127, %128 : vector<8x128xf32>
    %130 = arith.select %5, %125, %129 : vector<8x128xi1>, vector<8x128xf32>
    %131 = vector.extract_strided_slice %130 {offsets = [0, 0], sizes = [8, 32], strides = [1, 1]} : vector<8x128xf32> to vector<8x32xf32>
    %132 = vector.extract_strided_slice %130 {offsets = [0, 32], sizes = [8, 32], strides = [1, 1]} : vector<8x128xf32> to vector<8x32xf32>
    %133 = vector.extract_strided_slice %130 {offsets = [0, 64], sizes = [8, 32], strides = [1, 1]} : vector<8x128xf32> to vector<8x32xf32>
    %134 = vector.extract_strided_slice %130 {offsets = [0, 96], sizes = [8, 32], strides = [1, 1]} : vector<8x128xf32> to vector<8x32xf32>
    %135 = arith.mulf %132, %117 : vector<8x32xf32>
    %136 = arith.mulf %131, %133 : vector<8x32xf32>
    %137 = arith.addf %135, %136 : vector<8x32xf32>
    %138 = math.tanh %137 : vector<8x32xf32>
    %139 = arith.mulf %134, %138 : vector<8x32xf32>
    %140 = arith.truncf %139 : vector<8x32xf32> to vector<8x32xbf16>
    %cst_33 = arith.constant dense<0.000000e+00> : vector<8x128xf32>
    %141 = tpu.matmul %140, %11, %cst_33 {dimension_numbers = #tpu.dot_dimension_numbers<[1], [0], [0], [1], [0, 0, 1, 1], [], []>} : vector<8x32xbf16>, vector<32x128xbf16>, vector<8x128xf32> -> vector<8x128xf32>
    %142 = vector.extract_strided_slice %15 {offsets = [48, 0], sizes = [8, 128], strides = [1, 1]} : vector<64x128xf32> to vector<8x128xf32>
    %143 = arith.addf %142, %141 : vector<8x128xf32>
    %144 = arith.mulf %143, %8 : vector<8x128xf32>
    %145 = math.tanh %144 : vector<8x128xf32>
    %cst_34 = arith.constant 5.000000e-01 : f32
    %146 = vector.broadcast %cst_34 : f32 to vector<8x128xf32>
    %147 = arith.mulf %146, %145 : vector<8x128xf32>
    %cst_35 = arith.constant 5.000000e-01 : f32
    %148 = vector.broadcast %cst_35 : f32 to vector<8x128xf32>
    %149 = arith.addf %147, %148 : vector<8x128xf32>
    %150 = arith.select %5, %145, %149 : vector<8x128xi1>, vector<8x128xf32>
    %151 = vector.extract_strided_slice %150 {offsets = [0, 0], sizes = [8, 32], strides = [1, 1]} : vector<8x128xf32> to vector<8x32xf32>
    %152 = vector.extract_strided_slice %150 {offsets = [0, 32], sizes = [8, 32], strides = [1, 1]} : vector<8x128xf32> to vector<8x32xf32>
    %153 = vector.extract_strided_slice %150 {offsets = [0, 64], sizes = [8, 32], strides = [1, 1]} : vector<8x128xf32> to vector<8x32xf32>
    %154 = vector.extract_strided_slice %150 {offsets = [0, 96], sizes = [8, 32], strides = [1, 1]} : vector<8x128xf32> to vector<8x32xf32>
    %155 = arith.mulf %152, %137 : vector<8x32xf32>
    %156 = arith.mulf %151, %153 : vector<8x32xf32>
    %157 = arith.addf %155, %156 : vector<8x32xf32>
    %158 = math.tanh %157 : vector<8x32xf32>
    %159 = arith.mulf %154, %158 : vector<8x32xf32>
    %160 = arith.truncf %159 : vector<8x32xf32> to vector<8x32xbf16>
    %cst_36 = arith.constant dense<0.000000e+00> : vector<8x128xf32>
    %161 = tpu.matmul %160, %11, %cst_36 {dimension_numbers = #tpu.dot_dimension_numbers<[1], [0], [0], [1], [0, 0, 1, 1], [], []>} : vector<8x32xbf16>, vector<32x128xbf16>, vector<8x128xf32> -> vector<8x128xf32>
    %162 = vector.extract_strided_slice %15 {offsets = [56, 0], sizes = [8, 128], strides = [1, 1]} : vector<64x128xf32> to vector<8x128xf32>
    %163 = arith.addf %162, %161 : vector<8x128xf32>
    %164 = arith.mulf %163, %8 : vector<8x128xf32>
    %165 = math.tanh %164 : vector<8x128xf32>
    %cst_37 = arith.constant 5.000000e-01 : f32
    %166 = vector.broadcast %cst_37 : f32 to vector<8x128xf32>
    %167 = arith.mulf %166, %165 : vector<8x128xf32>
    %cst_38 = arith.constant 5.000000e-01 : f32
    %168 = vector.broadcast %cst_38 : f32 to vector<8x128xf32>
    %169 = arith.addf %167, %168 : vector<8x128xf32>
    %170 = arith.select %5, %165, %169 : vector<8x128xi1>, vector<8x128xf32>
    %171 = vector.extract_strided_slice %170 {offsets = [0, 0], sizes = [8, 32], strides = [1, 1]} : vector<8x128xf32> to vector<8x32xf32>
    %172 = vector.extract_strided_slice %170 {offsets = [0, 32], sizes = [8, 32], strides = [1, 1]} : vector<8x128xf32> to vector<8x32xf32>
    %173 = vector.extract_strided_slice %170 {offsets = [0, 64], sizes = [8, 32], strides = [1, 1]} : vector<8x128xf32> to vector<8x32xf32>
    %174 = vector.extract_strided_slice %170 {offsets = [0, 96], sizes = [8, 32], strides = [1, 1]} : vector<8x128xf32> to vector<8x32xf32>
    %175 = arith.mulf %172, %157 : vector<8x32xf32>
    %176 = arith.mulf %171, %173 : vector<8x32xf32>
    %177 = arith.addf %175, %176 : vector<8x32xf32>
    %178 = math.tanh %177 : vector<8x32xf32>
    %179 = arith.mulf %174, %178 : vector<8x32xf32>
    %c0_39 = arith.constant 0 : index
    %c0_40 = arith.constant 0 : index
    %c0_41 = arith.constant 0 : index
    %180 = vector.load %arg12[%c0_39, %c0_40, %c0_41] : memref<2x8x32xf32, #tpu.memory_space<vmem>>, vector<1x8x32xf32>
    %181 = vector.shape_cast %180 : vector<1x8x32xf32> to vector<8x32xf32>
    %182 = vector.shape_cast %179 : vector<8x32xf32> to vector<1x8x32xf32>
    tpu.vector_store %arg12[%c0_39, %c0_40, %c0_41], %182 {strides = array<i32>} : memref<2x8x32xf32, #tpu.memory_space<vmem>>, vector<1x8x32xf32>,
    %c0_42 = arith.constant 0 : index
    %c0_43 = arith.constant 0 : index
    %c0_44 = arith.constant 0 : index
    %183 = vector.load %arg13[%c0_42, %c0_43, %c0_44] : memref<2x8x32xf32, #tpu.memory_space<vmem>>, vector<1x8x32xf32>
    %184 = vector.shape_cast %183 : vector<1x8x32xf32> to vector<8x32xf32>
    %185 = vector.shape_cast %177 : vector<8x32xf32> to vector<1x8x32xf32>
    tpu.vector_store %arg13[%c0_42, %c0_43, %c0_44], %185 {strides = array<i32>} : memref<2x8x32xf32, #tpu.memory_space<vmem>>, vector<1x8x32xf32>,
    %186 = tpu.concatenate %39, %59, %79, %99, %119, %139, %159, %179 in 0 : vector<8x32xf32>, vector<8x32xf32>, vector<8x32xf32>, vector<8x32xf32>, vector<8x32xf32>, vector<8x32xf32>, vector<8x32xf32>, vector<8x32xf32> -> vector<64x32xf32>
    %c0_45 = arith.constant 0 : index
    %c0_46 = arith.constant 0 : index
    %187 = vector.load %arg6[%c0_45, %c0_46] : memref<32x128xf32, #tpu.memory_space<vmem>>, vector<32x128xf32>
    %c0_47 = arith.constant 0 : index
    %c0_48 = arith.constant 0 : index
    %188 = vector.load %arg7[%c0_47, %c0_48] : memref<32x128xbf16, #tpu.memory_space<vmem>>, vector<32x128xbf16>
    %c0_49 = arith.constant 0 : index
    %c0_50 = arith.constant 0 : index
    %189 = vector.load %arg8[%c0_49, %c0_50] : memref<1x128xf32, #tpu.memory_space<vmem>>, vector<1x128xf32>
    %cst_51 = arith.constant dense<0.000000e+00> : vector<64x128xf32>
    %190 = tpu.matmul %186, %187, %cst_51 {dimension_numbers = #tpu.dot_dimension_numbers<[1], [0], [0], [1], [0, 0, 1, 1], [], []>} : vector<64x32xf32>, vector<32x128xf32>, vector<64x128xf32> -> vector<64x128xf32>
    %191 = vector.broadcast %189 : vector<1x128xf32> to vector<64x128xf32>
    %192 = arith.addf %190, %191 : vector<64x128xf32>
    %c1 = arith.constant 1 : index
    %c0_52 = arith.constant 0 : index
    %c0_53 = arith.constant 0 : index
    %193 = vector.load %arg1[%c1, %c0_52, %c0_53] : memref<2x8x32xf32, #tpu.memory_space<vmem>>, vector<1x8x32xf32>
    %194 = vector.shape_cast %193 : vector<1x8x32xf32> to vector<8x32xf32>
    %c1_54 = arith.constant 1 : index
    %c0_55 = arith.constant 0 : index
    %c0_56 = arith.constant 0 : index
    %195 = vector.load %arg2[%c1_54, %c0_55, %c0_56] : memref<2x8x32xf32, #tpu.memory_space<vmem>>, vector<1x8x32xf32>
    %196 = vector.shape_cast %195 : vector<1x8x32xf32> to vector<8x32xf32>
    %197 = arith.truncf %194 : vector<8x32xf32> to vector<8x32xbf16>
    %cst_57 = arith.constant dense<0.000000e+00> : vector<8x128xf32>
    %198 = tpu.matmul %197, %188, %cst_57 {dimension_numbers = #tpu.dot_dimension_numbers<[1], [0], [0], [1], [0, 0, 1, 1], [], []>} : vector<8x32xbf16>, vector<32x128xbf16>, vector<8x128xf32> -> vector<8x128xf32>
    %199 = vector.extract_strided_slice %192 {offsets = [0, 0], sizes = [8, 128], strides = [1, 1]} : vector<64x128xf32> to vector<8x128xf32>
    %200 = arith.addf %199, %198 : vector<8x128xf32>
    %201 = arith.mulf %200, %8 : vector<8x128xf32>
    %202 = math.tanh %201 : vector<8x128xf32>
    %cst_58 = arith.constant 5.000000e-01 : f32
    %203 = vector.broadcast %cst_58 : f32 to vector<8x128xf32>
    %204 = arith.mulf %203, %202 : vector<8x128xf32>
    %cst_59 = arith.constant 5.000000e-01 : f32
    %205 = vector.broadcast %cst_59 : f32 to vector<8x128xf32>
    %206 = arith.addf %204, %205 : vector<8x128xf32>
    %207 = arith.select %5, %202, %206 : vector<8x128xi1>, vector<8x128xf32>
    %208 = vector.extract_strided_slice %207 {offsets = [0, 0], sizes = [8, 32], strides = [1, 1]} : vector<8x128xf32> to vector<8x32xf32>
    %209 = vector.extract_strided_slice %207 {offsets = [0, 32], sizes = [8, 32], strides = [1, 1]} : vector<8x128xf32> to vector<8x32xf32>
    %210 = vector.extract_strided_slice %207 {offsets = [0, 64], sizes = [8, 32], strides = [1, 1]} : vector<8x128xf32> to vector<8x32xf32>
    %211 = vector.extract_strided_slice %207 {offsets = [0, 96], sizes = [8, 32], strides = [1, 1]} : vector<8x128xf32> to vector<8x32xf32>
    %212 = arith.mulf %209, %196 : vector<8x32xf32>
    %213 = arith.mulf %208, %210 : vector<8x32xf32>
    %214 = arith.addf %212, %213 : vector<8x32xf32>
    %215 = math.tanh %214 : vector<8x32xf32>
    %216 = arith.mulf %211, %215 : vector<8x32xf32>
    %217 = arith.truncf %216 : vector<8x32xf32> to vector<8x32xbf16>
    %cst_60 = arith.constant dense<0.000000e+00> : vector<8x128xf32>
    %218 = tpu.matmul %217, %188, %cst_60 {dimension_numbers = #tpu.dot_dimension_numbers<[1], [0], [0], [1], [0, 0, 1, 1], [], []>} : vector<8x32xbf16>, vector<32x128xbf16>, vector<8x128xf32> -> vector<8x128xf32>
    %219 = vector.extract_strided_slice %192 {offsets = [8, 0], sizes = [8, 128], strides = [1, 1]} : vector<64x128xf32> to vector<8x128xf32>
    %220 = arith.addf %219, %218 : vector<8x128xf32>
    %221 = arith.mulf %220, %8 : vector<8x128xf32>
    %222 = math.tanh %221 : vector<8x128xf32>
    %cst_61 = arith.constant 5.000000e-01 : f32
    %223 = vector.broadcast %cst_61 : f32 to vector<8x128xf32>
    %224 = arith.mulf %223, %222 : vector<8x128xf32>
    %cst_62 = arith.constant 5.000000e-01 : f32
    %225 = vector.broadcast %cst_62 : f32 to vector<8x128xf32>
    %226 = arith.addf %224, %225 : vector<8x128xf32>
    %227 = arith.select %5, %222, %226 : vector<8x128xi1>, vector<8x128xf32>
    %228 = vector.extract_strided_slice %227 {offsets = [0, 0], sizes = [8, 32], strides = [1, 1]} : vector<8x128xf32> to vector<8x32xf32>
    %229 = vector.extract_strided_slice %227 {offsets = [0, 32], sizes = [8, 32], strides = [1, 1]} : vector<8x128xf32> to vector<8x32xf32>
    %230 = vector.extract_strided_slice %227 {offsets = [0, 64], sizes = [8, 32], strides = [1, 1]} : vector<8x128xf32> to vector<8x32xf32>
    %231 = vector.extract_strided_slice %227 {offsets = [0, 96], sizes = [8, 32], strides = [1, 1]} : vector<8x128xf32> to vector<8x32xf32>
    %232 = arith.mulf %229, %214 : vector<8x32xf32>
    %233 = arith.mulf %228, %230 : vector<8x32xf32>
    %234 = arith.addf %232, %233 : vector<8x32xf32>
    %235 = math.tanh %234 : vector<8x32xf32>
    %236 = arith.mulf %231, %235 : vector<8x32xf32>
    %237 = arith.truncf %236 : vector<8x32xf32> to vector<8x32xbf16>
    %cst_63 = arith.constant dense<0.000000e+00> : vector<8x128xf32>
    %238 = tpu.matmul %237, %188, %cst_63 {dimension_numbers = #tpu.dot_dimension_numbers<[1], [0], [0], [1], [0, 0, 1, 1], [], []>} : vector<8x32xbf16>, vector<32x128xbf16>, vector<8x128xf32> -> vector<8x128xf32>
    %239 = vector.extract_strided_slice %192 {offsets = [16, 0], sizes = [8, 128], strides = [1, 1]} : vector<64x128xf32> to vector<8x128xf32>
    %240 = arith.addf %239, %238 : vector<8x128xf32>
    %241 = arith.mulf %240, %8 : vector<8x128xf32>
    %242 = math.tanh %241 : vector<8x128xf32>
    %cst_64 = arith.constant 5.000000e-01 : f32
    %243 = vector.broadcast %cst_64 : f32 to vector<8x128xf32>
    %244 = arith.mulf %243, %242 : vector<8x128xf32>
    %cst_65 = arith.constant 5.000000e-01 : f32
    %245 = vector.broadcast %cst_65 : f32 to vector<8x128xf32>
    %246 = arith.addf %244, %245 : vector<8x128xf32>
    %247 = arith.select %5, %242, %246 : vector<8x128xi1>, vector<8x128xf32>
    %248 = vector.extract_strided_slice %247 {offsets = [0, 0], sizes = [8, 32], strides = [1, 1]} : vector<8x128xf32> to vector<8x32xf32>
    %249 = vector.extract_strided_slice %247 {offsets = [0, 32], sizes = [8, 32], strides = [1, 1]} : vector<8x128xf32> to vector<8x32xf32>
    %250 = vector.extract_strided_slice %247 {offsets = [0, 64], sizes = [8, 32], strides = [1, 1]} : vector<8x128xf32> to vector<8x32xf32>
    %251 = vector.extract_strided_slice %247 {offsets = [0, 96], sizes = [8, 32], strides = [1, 1]} : vector<8x128xf32> to vector<8x32xf32>
    %252 = arith.mulf %249, %234 : vector<8x32xf32>
    %253 = arith.mulf %248, %250 : vector<8x32xf32>
    %254 = arith.addf %252, %253 : vector<8x32xf32>
    %255 = math.tanh %254 : vector<8x32xf32>
    %256 = arith.mulf %251, %255 : vector<8x32xf32>
    %257 = arith.truncf %256 : vector<8x32xf32> to vector<8x32xbf16>
    %cst_66 = arith.constant dense<0.000000e+00> : vector<8x128xf32>
    %258 = tpu.matmul %257, %188, %cst_66 {dimension_numbers = #tpu.dot_dimension_numbers<[1], [0], [0], [1], [0, 0, 1, 1], [], []>} : vector<8x32xbf16>, vector<32x128xbf16>, vector<8x128xf32> -> vector<8x128xf32>
    %259 = vector.extract_strided_slice %192 {offsets = [24, 0], sizes = [8, 128], strides = [1, 1]} : vector<64x128xf32> to vector<8x128xf32>
    %260 = arith.addf %259, %258 : vector<8x128xf32>
    %261 = arith.mulf %260, %8 : vector<8x128xf32>
    %262 = math.tanh %261 : vector<8x128xf32>
    %cst_67 = arith.constant 5.000000e-01 : f32
    %263 = vector.broadcast %cst_67 : f32 to vector<8x128xf32>
    %264 = arith.mulf %263, %262 : vector<8x128xf32>
    %cst_68 = arith.constant 5.000000e-01 : f32
    %265 = vector.broadcast %cst_68 : f32 to vector<8x128xf32>
    %266 = arith.addf %264, %265 : vector<8x128xf32>
    %267 = arith.select %5, %262, %266 : vector<8x128xi1>, vector<8x128xf32>
    %268 = vector.extract_strided_slice %267 {offsets = [0, 0], sizes = [8, 32], strides = [1, 1]} : vector<8x128xf32> to vector<8x32xf32>
    %269 = vector.extract_strided_slice %267 {offsets = [0, 32], sizes = [8, 32], strides = [1, 1]} : vector<8x128xf32> to vector<8x32xf32>
    %270 = vector.extract_strided_slice %267 {offsets = [0, 64], sizes = [8, 32], strides = [1, 1]} : vector<8x128xf32> to vector<8x32xf32>
    %271 = vector.extract_strided_slice %267 {offsets = [0, 96], sizes = [8, 32], strides = [1, 1]} : vector<8x128xf32> to vector<8x32xf32>
    %272 = arith.mulf %269, %254 : vector<8x32xf32>
    %273 = arith.mulf %268, %270 : vector<8x32xf32>
    %274 = arith.addf %272, %273 : vector<8x32xf32>
    %275 = math.tanh %274 : vector<8x32xf32>
    %276 = arith.mulf %271, %275 : vector<8x32xf32>
    %277 = arith.truncf %276 : vector<8x32xf32> to vector<8x32xbf16>
    %cst_69 = arith.constant dense<0.000000e+00> : vector<8x128xf32>
    %278 = tpu.matmul %277, %188, %cst_69 {dimension_numbers = #tpu.dot_dimension_numbers<[1], [0], [0], [1], [0, 0, 1, 1], [], []>} : vector<8x32xbf16>, vector<32x128xbf16>, vector<8x128xf32> -> vector<8x128xf32>
    %279 = vector.extract_strided_slice %192 {offsets = [32, 0], sizes = [8, 128], strides = [1, 1]} : vector<64x128xf32> to vector<8x128xf32>
    %280 = arith.addf %279, %278 : vector<8x128xf32>
    %281 = arith.mulf %280, %8 : vector<8x128xf32>
    %282 = math.tanh %281 : vector<8x128xf32>
    %cst_70 = arith.constant 5.000000e-01 : f32
    %283 = vector.broadcast %cst_70 : f32 to vector<8x128xf32>
    %284 = arith.mulf %283, %282 : vector<8x128xf32>
    %cst_71 = arith.constant 5.000000e-01 : f32
    %285 = vector.broadcast %cst_71 : f32 to vector<8x128xf32>
    %286 = arith.addf %284, %285 : vector<8x128xf32>
    %287 = arith.select %5, %282, %286 : vector<8x128xi1>, vector<8x128xf32>
    %288 = vector.extract_strided_slice %287 {offsets = [0, 0], sizes = [8, 32], strides = [1, 1]} : vector<8x128xf32> to vector<8x32xf32>
    %289 = vector.extract_strided_slice %287 {offsets = [0, 32], sizes = [8, 32], strides = [1, 1]} : vector<8x128xf32> to vector<8x32xf32>
    %290 = vector.extract_strided_slice %287 {offsets = [0, 64], sizes = [8, 32], strides = [1, 1]} : vector<8x128xf32> to vector<8x32xf32>
    %291 = vector.extract_strided_slice %287 {offsets = [0, 96], sizes = [8, 32], strides = [1, 1]} : vector<8x128xf32> to vector<8x32xf32>
    %292 = arith.mulf %289, %274 : vector<8x32xf32>
    %293 = arith.mulf %288, %290 : vector<8x32xf32>
    %294 = arith.addf %292, %293 : vector<8x32xf32>
    %295 = math.tanh %294 : vector<8x32xf32>
    %296 = arith.mulf %291, %295 : vector<8x32xf32>
    %297 = arith.truncf %296 : vector<8x32xf32> to vector<8x32xbf16>
    %cst_72 = arith.constant dense<0.000000e+00> : vector<8x128xf32>
    %298 = tpu.matmul %297, %188, %cst_72 {dimension_numbers = #tpu.dot_dimension_numbers<[1], [0], [0], [1], [0, 0, 1, 1], [], []>} : vector<8x32xbf16>, vector<32x128xbf16>, vector<8x128xf32> -> vector<8x128xf32>
    %299 = vector.extract_strided_slice %192 {offsets = [40, 0], sizes = [8, 128], strides = [1, 1]} : vector<64x128xf32> to vector<8x128xf32>
    %300 = arith.addf %299, %298 : vector<8x128xf32>
    %301 = arith.mulf %300, %8 : vector<8x128xf32>
    %302 = math.tanh %301 : vector<8x128xf32>
    %cst_73 = arith.constant 5.000000e-01 : f32
    %303 = vector.broadcast %cst_73 : f32 to vector<8x128xf32>
    %304 = arith.mulf %303, %302 : vector<8x128xf32>
    %cst_74 = arith.constant 5.000000e-01 : f32
    %305 = vector.broadcast %cst_74 : f32 to vector<8x128xf32>
    %306 = arith.addf %304, %305 : vector<8x128xf32>
    %307 = arith.select %5, %302, %306 : vector<8x128xi1>, vector<8x128xf32>
    %308 = vector.extract_strided_slice %307 {offsets = [0, 0], sizes = [8, 32], strides = [1, 1]} : vector<8x128xf32> to vector<8x32xf32>
    %309 = vector.extract_strided_slice %307 {offsets = [0, 32], sizes = [8, 32], strides = [1, 1]} : vector<8x128xf32> to vector<8x32xf32>
    %310 = vector.extract_strided_slice %307 {offsets = [0, 64], sizes = [8, 32], strides = [1, 1]} : vector<8x128xf32> to vector<8x32xf32>
    %311 = vector.extract_strided_slice %307 {offsets = [0, 96], sizes = [8, 32], strides = [1, 1]} : vector<8x128xf32> to vector<8x32xf32>
    %312 = arith.mulf %309, %294 : vector<8x32xf32>
    %313 = arith.mulf %308, %310 : vector<8x32xf32>
    %314 = arith.addf %312, %313 : vector<8x32xf32>
    %315 = math.tanh %314 : vector<8x32xf32>
    %316 = arith.mulf %311, %315 : vector<8x32xf32>
    %317 = arith.truncf %316 : vector<8x32xf32> to vector<8x32xbf16>
    %cst_75 = arith.constant dense<0.000000e+00> : vector<8x128xf32>
    %318 = tpu.matmul %317, %188, %cst_75 {dimension_numbers = #tpu.dot_dimension_numbers<[1], [0], [0], [1], [0, 0, 1, 1], [], []>} : vector<8x32xbf16>, vector<32x128xbf16>, vector<8x128xf32> -> vector<8x128xf32>
    %319 = vector.extract_strided_slice %192 {offsets = [48, 0], sizes = [8, 128], strides = [1, 1]} : vector<64x128xf32> to vector<8x128xf32>
    %320 = arith.addf %319, %318 : vector<8x128xf32>
    %321 = arith.mulf %320, %8 : vector<8x128xf32>
    %322 = math.tanh %321 : vector<8x128xf32>
    %cst_76 = arith.constant 5.000000e-01 : f32
    %323 = vector.broadcast %cst_76 : f32 to vector<8x128xf32>
    %324 = arith.mulf %323, %322 : vector<8x128xf32>
    %cst_77 = arith.constant 5.000000e-01 : f32
    %325 = vector.broadcast %cst_77 : f32 to vector<8x128xf32>
    %326 = arith.addf %324, %325 : vector<8x128xf32>
    %327 = arith.select %5, %322, %326 : vector<8x128xi1>, vector<8x128xf32>
    %328 = vector.extract_strided_slice %327 {offsets = [0, 0], sizes = [8, 32], strides = [1, 1]} : vector<8x128xf32> to vector<8x32xf32>
    %329 = vector.extract_strided_slice %327 {offsets = [0, 32], sizes = [8, 32], strides = [1, 1]} : vector<8x128xf32> to vector<8x32xf32>
    %330 = vector.extract_strided_slice %327 {offsets = [0, 64], sizes = [8, 32], strides = [1, 1]} : vector<8x128xf32> to vector<8x32xf32>
    %331 = vector.extract_strided_slice %327 {offsets = [0, 96], sizes = [8, 32], strides = [1, 1]} : vector<8x128xf32> to vector<8x32xf32>
    %332 = arith.mulf %329, %314 : vector<8x32xf32>
    %333 = arith.mulf %328, %330 : vector<8x32xf32>
    %334 = arith.addf %332, %333 : vector<8x32xf32>
    %335 = math.tanh %334 : vector<8x32xf32>
    %336 = arith.mulf %331, %335 : vector<8x32xf32>
    %337 = arith.truncf %336 : vector<8x32xf32> to vector<8x32xbf16>
    %cst_78 = arith.constant dense<0.000000e+00> : vector<8x128xf32>
    %338 = tpu.matmul %337, %188, %cst_78 {dimension_numbers = #tpu.dot_dimension_numbers<[1], [0], [0], [1], [0, 0, 1, 1], [], []>} : vector<8x32xbf16>, vector<32x128xbf16>, vector<8x128xf32> -> vector<8x128xf32>
    %339 = vector.extract_strided_slice %192 {offsets = [56, 0], sizes = [8, 128], strides = [1, 1]} : vector<64x128xf32> to vector<8x128xf32>
    %340 = arith.addf %339, %338 : vector<8x128xf32>
    %341 = arith.mulf %340, %8 : vector<8x128xf32>
    %342 = math.tanh %341 : vector<8x128xf32>
    %cst_79 = arith.constant 5.000000e-01 : f32
    %343 = vector.broadcast %cst_79 : f32 to vector<8x128xf32>
    %344 = arith.mulf %343, %342 : vector<8x128xf32>
    %cst_80 = arith.constant 5.000000e-01 : f32
    %345 = vector.broadcast %cst_80 : f32 to vector<8x128xf32>
    %346 = arith.addf %344, %345 : vector<8x128xf32>
    %347 = arith.select %5, %342, %346 : vector<8x128xi1>, vector<8x128xf32>
    %348 = vector.extract_strided_slice %347 {offsets = [0, 0], sizes = [8, 32], strides = [1, 1]} : vector<8x128xf32> to vector<8x32xf32>
    %349 = vector.extract_strided_slice %347 {offsets = [0, 32], sizes = [8, 32], strides = [1, 1]} : vector<8x128xf32> to vector<8x32xf32>
    %350 = vector.extract_strided_slice %347 {offsets = [0, 64], sizes = [8, 32], strides = [1, 1]} : vector<8x128xf32> to vector<8x32xf32>
    %351 = vector.extract_strided_slice %347 {offsets = [0, 96], sizes = [8, 32], strides = [1, 1]} : vector<8x128xf32> to vector<8x32xf32>
    %352 = arith.mulf %349, %334 : vector<8x32xf32>
    %353 = arith.mulf %348, %350 : vector<8x32xf32>
    %354 = arith.addf %352, %353 : vector<8x32xf32>
    %355 = math.tanh %354 : vector<8x32xf32>
    %356 = arith.mulf %351, %355 : vector<8x32xf32>
    %c1_81 = arith.constant 1 : index
    %c0_82 = arith.constant 0 : index
    %c0_83 = arith.constant 0 : index
    %357 = vector.load %arg12[%c1_81, %c0_82, %c0_83] : memref<2x8x32xf32, #tpu.memory_space<vmem>>, vector<1x8x32xf32>
    %358 = vector.shape_cast %357 : vector<1x8x32xf32> to vector<8x32xf32>
    %359 = vector.shape_cast %356 : vector<8x32xf32> to vector<1x8x32xf32>
    tpu.vector_store %arg12[%c1_81, %c0_82, %c0_83], %359 {strides = array<i32>} : memref<2x8x32xf32, #tpu.memory_space<vmem>>, vector<1x8x32xf32>,
    %c1_84 = arith.constant 1 : index
    %c0_85 = arith.constant 0 : index
    %c0_86 = arith.constant 0 : index
    %360 = vector.load %arg13[%c1_84, %c0_85, %c0_86] : memref<2x8x32xf32, #tpu.memory_space<vmem>>, vector<1x8x32xf32>
    %361 = vector.shape_cast %360 : vector<1x8x32xf32> to vector<8x32xf32>
    %362 = vector.shape_cast %354 : vector<8x32xf32> to vector<1x8x32xf32>
    tpu.vector_store %arg13[%c1_84, %c0_85, %c0_86], %362 {strides = array<i32>} : memref<2x8x32xf32, #tpu.memory_space<vmem>>, vector<1x8x32xf32>,
    %c0_87 = arith.constant 0 : index
    %c0_88 = arith.constant 0 : index
    %363 = vector.load %arg9[%c0_87, %c0_88] : memref<32x4xf32, #tpu.memory_space<vmem>>, vector<32x4xf32>
    %cst_89 = arith.constant dense<0.000000e+00> : vector<8x4xf32>
    %364 = tpu.matmul %356, %363, %cst_89 {dimension_numbers = #tpu.dot_dimension_numbers<[1], [0], [0], [1], [0, 0, 1, 1], [], []>} : vector<8x32xf32>, vector<32x4xf32>, vector<8x4xf32> -> vector<8x4xf32>
    %c0_90 = arith.constant 0 : index
    %c0_91 = arith.constant 0 : index
    %365 = vector.load %arg10[%c0_90, %c0_91] : memref<1x4xf32, #tpu.memory_space<vmem>>, vector<1x4xf32>
    %366 = vector.broadcast %365 : vector<1x4xf32> to vector<8x4xf32>
    %367 = arith.addf %364, %366 : vector<8x4xf32>
    %cst_92 = arith.constant 0.000000e+00 : f32
    %368 = vector.broadcast %cst_92 : f32 to vector<8x4xf32>
    %369 = arith.cmpf oge, %367, %368 : vector<8x4xf32>
    %cst_93 = arith.constant 0.00999999977 : f32
    %370 = vector.broadcast %cst_93 : f32 to vector<8x4xf32>
    %371 = arith.mulf %370, %367 : vector<8x4xf32>
    %372 = arith.select %369, %367, %371 : vector<8x4xi1>, vector<8x4xf32>
    %c0_94 = arith.constant 0 : index
    %c0_95 = arith.constant 0 : index
    %373 = vector.load %arg11[%c0_94, %c0_95] : memref<8x4xf32, #tpu.memory_space<vmem>>, vector<8x4xf32>
    tpu.vector_store %arg11[%c0_94, %c0_95], %372 {strides = array<i32>} : memref<8x4xf32, #tpu.memory_space<vmem>>, vector<8x4xf32>,
    return
  }
}

</mosaic_0001>

<llo_original>
// kernel: lstm_net_forward.1
$region0: #{lstm_net_forward.1}
  #allocation0 [shape = 'u32[]', space=smem, size = 0x4, offset = 0x4, fixed_abs, tag = 'smem constant byte address 0x4 - core index']
  #allocation1 [shape = 'u32[72,128]{1,0:T(1,128)}', space=vmem, size = 0x9000, scoped, tag = 'internal scratch']
  %s0 = inlined_call_operand.vmem [shape: f32[64,16], index: 0, kind: input, shape index: {}]
  %s1 = inlined_call_operand.vmem [shape: f32[2,8,32], index: 1, kind: input, shape index: {}]
  %s2 = inlined_call_operand.vmem [shape: f32[2,8,32], index: 2, kind: input, shape index: {}]
  %s3 = inlined_call_operand.vmem [shape: f32[16,128], index: 3, kind: input, shape index: {}]
  %s4 = inlined_call_operand.vmem [shape: bf16[32,128], index: 4, kind: input, shape index: {}]
  %s5 = inlined_call_operand.vmem [shape: f32[1,128], index: 5, kind: input, shape index: {}]
  %s6 = inlined_call_operand.vmem [shape: f32[32,128], index: 6, kind: input, shape index: {}]
  %s7 = inlined_call_operand.vmem [shape: bf16[32,128], index: 7, kind: input, shape index: {}]
  %s8 = inlined_call_operand.vmem [shape: f32[1,128], index: 8, kind: input, shape index: {}]
  %s9 = inlined_call_operand.vmem [shape: f32[32,4], index: 9, kind: input, shape index: {}]
  %s10 = inlined_call_operand.vmem [shape: f32[1,4], index: 10, kind: input, shape index: {}]
  %s11 = inlined_call_operand.vmem [shape: f32[8,4], index: 11, kind: output, shape index: {0}]
  %s12 = inlined_call_operand.vmem [shape: f32[2,8,32], index: 12, kind: output, shape index: {1}]
  %s13 = inlined_call_operand.vmem [shape: f32[2,8,32], index: 13, kind: output, shape index: {2}]
  %14 = xla_tuple %s11, %s12, %s13
  %s15 = sld [smem:[#allocation0]]
  $region70: #{lstm_net_forward.1} parent=0
    _
  %s17 = ssub.s32 1, %s15
  %s18 = scalar_select 0, %s17, %s15
  // Predicated region
  $region2: #{lstm_net_forward.1} parent=0 // pred_check
    _
  $region3: #{lstm_net_forward.1} parent=0 // pred_check_branch
    %20 = sbr.rel (0) target = $region5
  $region4: #{lstm_net_forward.1} parent=0 // pred_region
    _
  $region5: #{lstm_net_forward.1} parent=0 // pred_fallthru
    _
  // Predicated region
  $region6: #{lstm_net_forward.1} parent=0 // pred_check
    _
  $region7: #{lstm_net_forward.1} parent=0 // pred_check_branch
    %22 = sbr.rel (0) target = $region9
  $region8: #{lstm_net_forward.1} parent=0 // pred_region
    _
  $region9: #{lstm_net_forward.1} parent=0 // pred_fallthru
    _
  // Predicated region
  $region10: #{lstm_net_forward.1} parent=0 // pred_check
    _
  $region11: #{lstm_net_forward.1} parent=0 // pred_check_branch
    %24 = sbr.rel (0) target = $region13
  $region12: #{lstm_net_forward.1} parent=0 // pred_region
    _
  $region13: #{lstm_net_forward.1} parent=0 // pred_fallthru
    _
  // Predicated region
  $region14: #{lstm_net_forward.1} parent=0 // pred_check
    _
  $region15: #{lstm_net_forward.1} parent=0 // pred_check_branch
    %26 = sbr.rel (0) target = $region17
  $region16: #{lstm_net_forward.1} parent=0 // pred_region
    _
  $region17: #{lstm_net_forward.1} parent=0 // pred_fallthru
    _
  // Predicated region
  $region18: #{lstm_net_forward.1} parent=0 // pred_check
    _
  $region19: #{lstm_net_forward.1} parent=0 // pred_check_branch
    %28 = sbr.rel (0) target = $region21
  $region20: #{lstm_net_forward.1} parent=0 // pred_region
    _
  $region21: #{lstm_net_forward.1} parent=0 // pred_fallthru
    _
  // Predicated region
  $region22: #{lstm_net_forward.1} parent=0 // pred_check
    _
  $region23: #{lstm_net_forward.1} parent=0 // pred_check_branch
    %30 = sbr.rel (0) target = $region25
  $region24: #{lstm_net_forward.1} parent=0 // pred_region
    _
  $region25: #{lstm_net_forward.1} parent=0 // pred_fallthru
    _
  // Predicated region
  $region26: #{lstm_net_forward.1} parent=0 // pred_check
    _
  $region27: #{lstm_net_forward.1} parent=0 // pred_check_branch
    %32 = sbr.rel (0) target = $region29
  $region28: #{lstm_net_forward.1} parent=0 // pred_region
    _
  $region29: #{lstm_net_forward.1} parent=0 // pred_fallthru
    _
  // Predicated region
  $region30: #{lstm_net_forward.1} parent=0 // pred_check
    _
  $region31: #{lstm_net_forward.1} parent=0 // pred_check_branch
    %34 = sbr.rel (0) target = $region33
  $region32: #{lstm_net_forward.1} parent=0 // pred_region
    _
  $region33: #{lstm_net_forward.1} parent=0 // pred_fallthru
    _
  // Predicated region
  $region34: #{lstm_net_forward.1} parent=0 // pred_check
    _
  $region35: #{lstm_net_forward.1} parent=0 // pred_check_branch
    %36 = sbr.rel (0) target = $region37
  $region36: #{lstm_net_forward.1} parent=0 // pred_region
    _
  $region37: #{lstm_net_forward.1} parent=0 // pred_fallthru
    _
  // Predicated region
  $region38: #{lstm_net_forward.1} parent=0 // pred_check
    _
  $region39: #{lstm_net_forward.1} parent=0 // pred_check_branch
    %38 = sbr.rel (0) target = $region41
  $region40: #{lstm_net_forward.1} parent=0 // pred_region
    _
  $region41: #{lstm_net_forward.1} parent=0 // pred_fallthru
    _
  // Predicated region
  $region42: #{lstm_net_forward.1} parent=0 // pred_check
    _
  $region43: #{lstm_net_forward.1} parent=0 // pred_check_branch
    %40 = sbr.rel (0) target = $region45
  $region44: #{lstm_net_forward.1} parent=0 // pred_region
    _
  $region45: #{lstm_net_forward.1} parent=0 // pred_fallthru
    _
  %v42 = vlaneseq
  %v43 = vand.u32 %v42, 127
  %vm44 = vcmp.ge.s32.totalorder %v43, 64
  %vm45 = vcmp.lt.s32.totalorder %v43, 96
  %vm46 = vmand %vm44, %vm45
  %v47 = vsel %vm46, 1.0, 0.5
  %v48 = vld [vmem:[%s0] sm:$0xff]
  %v49 = vld [vmem:[%s0 + $0x8] sm:$0xff]
  %v50 = vld [vmem:[%s0 + $0x10] sm:$0xff]
  %v51 = vld [vmem:[%s0 + $0x18] sm:$0xff]
  %v52 = vld [vmem:[%s0 + $0x20] sm:$0xff]
  %v53 = vld [vmem:[%s0 + $0x28] sm:$0xff]
  %v54 = vld [vmem:[%s0 + $0x30] sm:$0xff]
  %v55 = vld [vmem:[%s0 + $0x38] sm:$0xff]
  %v56 = vld [vmem:[%s3] sm:$0xff]
  %v57 = vld [vmem:[%s3 + $0x8] sm:$0xff]
  %v58 = vld [vmem:[%s4] sm:$0xf]
  %v59 = vld [vmem:[%s4 + $0x4] sm:$0xf]
  %v60 = vld [vmem:[%s4 + $0x8] sm:$0xf]
  %v61 = vld [vmem:[%s4 + $0xc] sm:$0xf]
  %v62 = vld [vmem:[%s5] sm:$0x1]
  %v64 = vperm.slane %v62, 0
  %vm66 = vcmask 130048
  %v68 = vsel %vm66, %v48, 0
  %v71 = vsel %vm66, %v49, 0
  %v74 = vsel %vm66, %v50, 0
  %v77 = vsel %vm66, %v51, 0
  %v80 = vsel %vm66, %v52, 0
  %v83 = vsel %vm66, %v53, 0
  %v86 = vsel %vm66, %v54, 0
  %v89 = vsel %vm66, %v55, 0
  %91 = vmatpush.msra.mxu0 0.0
  %92 = vmatpush.msra.mxu0 0.0
  %93 = vmatpush.msra.mxu0 0.0
  %94 = vmatpush.msra.mxu0 0.0
  %95 = vmatpush.msra.mxu0 0.0
  %96 = vmatpush.msra.mxu0 0.0
  %97 = vmatpush.msra.mxu0 0.0
  %98 = vmatpush.msra.mxu0 0.0
  %99 = vmatpush.msra.mxu0 0.0
  %100 = vmatpush.msra.mxu0 0.0
  %101 = vmatpush.msra.mxu0 0.0
  %102 = vmatpush.msra.mxu0 0.0
  %103 = vmatpush.msra.mxu0 0.0
  %104 = vmatpush.msra.mxu0 0.0
  %105 = vmatpush.msra.mxu0 %v57
  %106 = vmatpush.msra.mxu0 %v56
  %107 = vmatmul.f32.gmra.mxu0 %v68
  %v108 = vpop.f32.mrf.mxu0
  %v109 = vadd.f32 %v64, %v108
  %110 = vmatmul.f32.gmra.mxu0 %v71
  %v111 = vpop.f32.mrf.mxu0
  %v112 = vadd.f32 %v64, %v111
  %113 = vmatmul.f32.gmra.mxu0 %v74
  %v114 = vpop.f32.mrf.mxu0
  %v115 = vadd.f32 %v64, %v114
  %116 = vmatmul.f32.gmra.mxu0 %v77
  %v117 = vpop.f32.mrf.mxu0
  %v118 = vadd.f32 %v64, %v117
  %119 = vmatmul.f32.gmra.mxu0 %v80
  %v120 = vpop.f32.mrf.mxu0
  %v121 = vadd.f32 %v64, %v120
  %122 = vmatmul.f32.gmra.mxu0 %v83
  %v123 = vpop.f32.mrf.mxu0
  %v124 = vadd.f32 %v64, %v123
  %125 = vmatmul.f32.gmra.mxu0 %v86
  %v126 = vpop.f32.mrf.mxu0
  %v127 = vadd.f32 %v64, %v126
  %128 = vmatmul.f32.gmra.mxu0 %v89
  %v129 = vpop.f32.mrf.mxu0
  %v130 = vadd.f32 %v64, %v129
  %131 = vdwg.mxu0
  %v132 = vld [vmem:[%s1] sm:$0xff]
  %v133 = vld [vmem:[%s2] sm:$0xff]
  %v134 = vpack.c.bf16 %v132, %v132
  %v139 = vunpack.c.l.b16 %v58
  %v140 = vunpack.c.l.b16 %v59
  %v141 = vunpack.c.l.b16 %v60
  %v142 = vunpack.c.l.b16 %v61
  %v143 = vpack.c.b16 %v140, %v139
  %v144 = vpack.c.b16 %v142, %v141
  %vm147 = vcmask 261120
  %v149 = vsel %vm147, %v134, 0
  %151 = vmatpush.bf16.msra.mxu0 0
  %152 = vmatpush.bf16.msra.mxu0 0
  %153 = vmatpush.bf16.msra.mxu0 0
  %154 = vmatpush.bf16.msra.mxu0 0
  %155 = vmatpush.bf16.msra.mxu0 0
  %156 = vmatpush.bf16.msra.mxu0 0
  %157 = vmatpush.bf16.msra.mxu0 %v144
  %158 = vmatpush.bf16.msra.mxu0 %v143
  %159 = vmatmul.bf16.gmra.mxu0 %v149
  %v160 = vpop.f32.mrf.mxu0
  %v161 = vadd.f32 0.0, %v160
  %v162 = vpop.f32.mrf.mxu0
  %163 = vdwg.mxu0
  %v164 = vadd.f32 %v109, %v161
  %v165 = vmul.f32 %v164, %v47
  %v166 = vtanh.pop %v165
  %v167 = vmul.f32 %v166, 0.5
  %v168 = vadd.f32 %v167, 0.5
  %v169 = vsel %vm46, %v166, %v168
  %171 = vrot.lane.b32.xlu0 %v133, 32
  %v172 = vpop.permute.xlu0 %171
  %v174 = vmul.f32 %v169, %v172
  %176 = vrot.lane.b32.xlu0 %v169, 64
  %v177 = vpop.permute.xlu0 %176
  %v179 = vmul.f32 %v169, %v177
  %181 = vrot.lane.b32.xlu0 %v179, 32
  %v182 = vpop.permute.xlu0 %181
  %v184 = vadd.f32 %v174, %v182
  %v185 = vtanh.pop %v184
  %187 = vrot.lane.b32.xlu0 %v185, 64
  %v188 = vpop.permute.xlu0 %187
  %v190 = vmul.f32 %v169, %v188
  %v191 = vpack.c.bf16 %v190, %v190
  %193 = vrot.lane.b32.xlu0 %v191, 32
  %v194 = vpop.permute.xlu0 %193
  %v196 = vsel %vm147, %v194, 0
  %198 = vmatpush.bf16.msra.mxu0 0
  %199 = vmatpush.bf16.msra.mxu0 0
  %200 = vmatpush.bf16.msra.mxu0 0
  %201 = vmatpush.bf16.msra.mxu0 0
  %202 = vmatpush.bf16.msra.mxu0 0
  %203 = vmatpush.bf16.msra.mxu0 0
  %204 = vmatpush.bf16.msra.mxu0 %v144
  %205 = vmatpush.bf16.msra.mxu0 %v143
  %206 = vmatmul.bf16.gmra.mxu0 %v196
  %v207 = vpop.f32.mrf.mxu0
  %v208 = vadd.f32 0.0, %v207
  %v209 = vpop.f32.mrf.mxu0
  %210 = vdwg.mxu0
  %v211 = vadd.f32 %v112, %v208
  %v212 = vmul.f32 %v211, %v47
  %v213 = vtanh.pop %v212
  %v214 = vmul.f32 %v213, 0.5
  %v215 = vadd.f32 %v214, 0.5
  %v216 = vsel %vm46, %v213, %v215
  %v217 = vmul.f32 %v216, %v184
  %219 = vrot.lane.b32.xlu0 %v216, 64
  %v220 = vpop.permute.xlu0 %219
  %v222 = vmul.f32 %v216, %v220
  %224 = vrot.lane.b32.xlu0 %v222, 32
  %v225 = vpop.permute.xlu0 %224
  %v227 = vadd.f32 %v217, %v225
  %v228 = vtanh.pop %v227
  %230 = vrot.lane.b32.xlu0 %v228, 64
  %v231 = vpop.permute.xlu0 %230
  %v233 = vmul.f32 %v216, %v231
  %v234 = vpack.c.bf16 %v233, %v233
  %236 = vrot.lane.b32.xlu0 %v234, 32
  %v237 = vpop.permute.xlu0 %236
  %v239 = vsel %vm147, %v237, 0
  %241 = vmatpush.bf16.msra.mxu0 0
  %242 = vmatpush.bf16.msra.mxu0 0
  %243 = vmatpush.bf16.msra.mxu0 0
  %244 = vmatpush.bf16.msra.mxu0 0
  %245 = vmatpush.bf16.msra.mxu0 0
  %246 = vmatpush.bf16.msra.mxu0 0
  %247 = vmatpush.bf16.msra.mxu0 %v144
  %248 = vmatpush.bf16.msra.mxu0 %v143
  %249 = vmatmul.bf16.gmra.mxu0 %v239
  %v250 = vpop.f32.mrf.mxu0
  %v251 = vadd.f32 0.0, %v250
  %v252 = vpop.f32.mrf.mxu0
  %253 = vdwg.mxu0
  %v254 = vadd.f32 %v115, %v251
  %v255 = vmul.f32 %v254, %v47
  %v256 = vtanh.pop %v255
  %v257 = vmul.f32 %v256, 0.5
  %v258 = vadd.f32 %v257, 0.5
  %v259 = vsel %vm46, %v256, %v258
  %v260 = vmul.f32 %v259, %v227
  %262 = vrot.lane.b32.xlu0 %v259, 64
  %v263 = vpop.permute.xlu0 %262
  %v265 = vmul.f32 %v259, %v263
  %267 = vrot.lane.b32.xlu0 %v265, 32
  %v268 = vpop.permute.xlu0 %267
  %v270 = vadd.f32 %v260, %v268
  %v271 = vtanh.pop %v270
  %273 = vrot.lane.b32.xlu0 %v271, 64
  %v274 = vpop.permute.xlu0 %273
  %v276 = vmul.f32 %v259, %v274
  %v277 = vpack.c.bf16 %v276, %v276
  %279 = vrot.lane.b32.xlu0 %v277, 32
  %v280 = vpop.permute.xlu0 %279
  %v282 = vsel %vm147, %v280, 0
  %284 = vmatpush.bf16.msra.mxu0 0
  %285 = vmatpush.bf16.msra.mxu0 0
  %286 = vmatpush.bf16.msra.mxu0 0
  %287 = vmatpush.bf16.msra.mxu0 0
  %288 = vmatpush.bf16.msra.mxu0 0
  %289 = vmatpush.bf16.msra.mxu0 0
  %290 = vmatpush.bf16.msra.mxu0 %v144
  %291 = vmatpush.bf16.msra.mxu0 %v143
  %292 = vmatmul.bf16.gmra.mxu0 %v282
  %v293 = vpop.f32.mrf.mxu0
  %v294 = vadd.f32 0.0, %v293
  %v295 = vpop.f32.mrf.mxu0
  %296 = vdwg.mxu0
  %v297 = vadd.f32 %v118, %v294
  %v298 = vmul.f32 %v297, %v47
  %v299 = vtanh.pop %v298
  %v300 = vmul.f32 %v299, 0.5
  %v301 = vadd.f32 %v300, 0.5
  %v302 = vsel %vm46, %v299, %v301
  %v303 = vmul.f32 %v302, %v270
  %305 = vrot.lane.b32.xlu0 %v302, 64
  %v306 = vpop.permute.xlu0 %305
  %v308 = vmul.f32 %v302, %v306
  %310 = vrot.lane.b32.xlu0 %v308, 32
  %v311 = vpop.permute.xlu0 %310
  %v313 = vadd.f32 %v303, %v311
  %v314 = vtanh.pop %v313
  %316 = vrot.lane.b32.xlu0 %v314, 64
  %v317 = vpop.permute.xlu0 %316
  %v319 = vmul.f32 %v302, %v317
  %v320 = vpack.c.bf16 %v319, %v319
  %322 = vrot.lane.b32.xlu0 %v320, 32
  %v323 = vpop.permute.xlu0 %322
  %v325 = vsel %vm147, %v323, 0
  %327 = vmatpush.bf16.msra.mxu0 0
  %328 = vmatpush.bf16.msra.mxu0 0
  %329 = vmatpush.bf16.msra.mxu0 0
  %330 = vmatpush.bf16.msra.mxu0 0
  %331 = vmatpush.bf16.msra.mxu0 0
  %332 = vmatpush.bf16.msra.mxu0 0
  %333 = vmatpush.bf16.msra.mxu0 %v144
  %334 = vmatpush.bf16.msra.mxu0 %v143
  %335 = vmatmul.bf16.gmra.mxu0 %v325
  %v336 = vpop.f32.mrf.mxu0
  %v337 = vadd.f32 0.0, %v336
  %v338 = vpop.f32.mrf.mxu0
  %339 = vdwg.mxu0
  %v340 = vadd.f32 %v121, %v337
  %v341 = vmul.f32 %v340, %v47
  %v342 = vtanh.pop %v341
  %v343 = vmul.f32 %v342, 0.5
  %v344 = vadd.f32 %v343, 0.5
  %v345 = vsel %vm46, %v342, %v344
  %v346 = vmul.f32 %v345, %v313
  %348 = vrot.lane.b32.xlu0 %v345, 64
  %v349 = vpop.permute.xlu0 %348
  %v351 = vmul.f32 %v345, %v349
  %353 = vrot.lane.b32.xlu0 %v351, 32
  %v354 = vpop.permute.xlu0 %353
  %v356 = vadd.f32 %v346, %v354
  %v357 = vtanh.pop %v356
  %359 = vrot.lane.b32.xlu0 %v357, 64
  %v360 = vpop.permute.xlu0 %359
  %v362 = vmul.f32 %v345, %v360
  %v363 = vpack.c.bf16 %v362, %v362
  %365 = vrot.lane.b32.xlu0 %v363, 32
  %v366 = vpop.permute.xlu0 %365
  %v368 = vsel %vm147, %v366, 0
  %370 = vmatpush.bf16.msra.mxu0 0
  %371 = vmatpush.bf16.msra.mxu0 0
  %372 = vmatpush.bf16.msra.mxu0 0
  %373 = vmatpush.bf16.msra.mxu0 0
  %374 = vmatpush.bf16.msra.mxu0 0
  %375 = vmatpush.bf16.msra.mxu0 0
  %376 = vmatpush.bf16.msra.mxu0 %v144
  %377 = vmatpush.bf16.msra.mxu0 %v143
  %378 = vmatmul.bf16.gmra.mxu0 %v368
  %v379 = vpop.f32.mrf.mxu0
  %v380 = vadd.f32 0.0, %v379
  %v381 = vpop.f32.mrf.mxu0
  %382 = vdwg.mxu0
  %v383 = vadd.f32 %v124, %v380
  %v384 = vmul.f32 %v383, %v47
  %v385 = vtanh.pop %v384
  %v386 = vmul.f32 %v385, 0.5
  %v387 = vadd.f32 %v386, 0.5
  %v388 = vsel %vm46, %v385, %v387
  %v389 = vmul.f32 %v388, %v356
  %391 = vrot.lane.b32.xlu0 %v388, 64
  %v392 = vpop.permute.xlu0 %391
  %v394 = vmul.f32 %v388, %v392
  %396 = vrot.lane.b32.xlu0 %v394, 32
  %v397 = vpop.permute.xlu0 %396
  %v399 = vadd.f32 %v389, %v397
  %v400 = vtanh.pop %v399
  %402 = vrot.lane.b32.xlu0 %v400, 64
  %v403 = vpop.permute.xlu0 %402
  %v405 = vmul.f32 %v388, %v403
  %v406 = vpack.c.bf16 %v405, %v405
  %408 = vrot.lane.b32.xlu0 %v406, 32
  %v409 = vpop.permute.xlu0 %408
  %v411 = vsel %vm147, %v409, 0
  %413 = vmatpush.bf16.msra.mxu0 0
  %414 = vmatpush.bf16.msra.mxu0 0
  %415 = vmatpush.bf16.msra.mxu0 0
  %416 = vmatpush.bf16.msra.mxu0 0
  %417 = vmatpush.bf16.msra.mxu0 0
  %418 = vmatpush.bf16.msra.mxu0 0
  %419 = vmatpush.bf16.msra.mxu0 %v144
  %420 = vmatpush.bf16.msra.mxu0 %v143
  %421 = vmatmul.bf16.gmra.mxu0 %v411
  %v422 = vpop.f32.mrf.mxu0
  %v423 = vadd.f32 0.0, %v422
  %v424 = vpop.f32.mrf.mxu0
  %425 = vdwg.mxu0
  %v426 = vadd.f32 %v127, %v423
  %v427 = vmul.f32 %v426, %v47
  %v428 = vtanh.pop %v427
  %v429 = vmul.f32 %v428, 0.5
  %v430 = vadd.f32 %v429, 0.5
  %v431 = vsel %vm46, %v428, %v430
  %v432 = vmul.f32 %v431, %v399
  %434 = vrot.lane.b32.xlu0 %v431, 64
  %v435 = vpop.permute.xlu0 %434
  %v437 = vmul.f32 %v431, %v435
  %439 = vrot.lane.b32.xlu0 %v437, 32
  %v440 = vpop.permute.xlu0 %439
  %v442 = vadd.f32 %v432, %v440
  %v443 = vtanh.pop %v442
  %445 = vrot.lane.b32.xlu0 %v443, 64
  %v446 = vpop.permute.xlu0 %445
  %v448 = vmul.f32 %v431, %v446
  %v449 = vpack.c.bf16 %v448, %v448
  %451 = vrot.lane.b32.xlu0 %v449, 32
  %v452 = vpop.permute.xlu0 %451
  %v454 = vsel %vm147, %v452, 0
  %456 = vmatpush.bf16.msra.mxu0 0
  %457 = vmatpush.bf16.msra.mxu0 0
  %458 = vmatpush.bf16.msra.mxu0 0
  %459 = vmatpush.bf16.msra.mxu0 0
  %460 = vmatpush.bf16.msra.mxu0 0
  %461 = vmatpush.bf16.msra.mxu0 0
  %462 = vmatpush.bf16.msra.mxu0 %v144
  %463 = vmatpush.bf16.msra.mxu0 %v143
  %464 = vmatmul.bf16.gmra.mxu0 %v454
  %v465 = vpop.f32.mrf.mxu0
  %v466 = vadd.f32 0.0, %v465
  %v467 = vpop.f32.mrf.mxu0
  %468 = vdwg.mxu0
  %v469 = vadd.f32 %v130, %v466
  %v470 = vmul.f32 %v469, %v47
  %v471 = vtanh.pop %v470
  %v472 = vmul.f32 %v471, 0.5
  %v473 = vadd.f32 %v472, 0.5
  %v474 = vsel %vm46, %v471, %v473
  %v475 = vmul.f32 %v474, %v442
  %477 = vrot.lane.b32.xlu0 %v474, 64
  %v478 = vpop.permute.xlu0 %477
  %v480 = vmul.f32 %v474, %v478
  %482 = vrot.lane.b32.xlu0 %v480, 32
  %v483 = vpop.permute.xlu0 %482
  %v485 = vadd.f32 %v475, %v483
  %v486 = vtanh.pop %v485
  %488 = vrot.lane.b32.xlu0 %v486, 64
  %v489 = vpop.permute.xlu0 %488
  %v491 = vmul.f32 %v474, %v489
  %493 = vrot.lane.b32.xlu0 %v491, 32
  %v494 = vpop.permute.xlu0 %493
  %496 = vst.msk [vmem:[%s12] sm:$0xff] %vm147, %v494
  %498 = vrot.lane.b32.xlu0 %v485, 96
  %v499 = vpop.permute.xlu0 %498
  %501 = vst.msk [vmem:[%s13] sm:$0xff] %vm147, %v499
  %v502 = vld [vmem:[%s6] sm:$0xff]
  %v503 = vld [vmem:[%s6 + $0x8] sm:$0xff]
  %v504 = vld [vmem:[%s6 + $0x10] sm:$0xff]
  %v505 = vld [vmem:[%s6 + $0x18] sm:$0xff]
  %v506 = vld [vmem:[%s7] sm:$0xf]
  %v507 = vld [vmem:[%s7 + $0x4] sm:$0xf]
  %v508 = vld [vmem:[%s7 + $0x8] sm:$0xf]
  %v509 = vld [vmem:[%s7 + $0xc] sm:$0xf]
  %v510 = vld [vmem:[%s8] sm:$0x1]
  %v512 = vperm.slane %v510, 0
  %521 = vrot.lane.b32.xlu0 %v190, 32
  %v522 = vpop.permute.xlu0 %521
  %523 = vrot.lane.b32.xlu0 %v233, 32
  %v524 = vpop.permute.xlu0 %523
  %525 = vrot.lane.b32.xlu0 %v276, 32
  %v526 = vpop.permute.xlu0 %525
  %527 = vrot.lane.b32.xlu0 %v319, 32
  %v528 = vpop.permute.xlu0 %527
  %529 = vrot.lane.b32.xlu0 %v362, 32
  %v530 = vpop.permute.xlu0 %529
  %531 = vrot.lane.b32.xlu0 %v405, 32
  %v532 = vpop.permute.xlu0 %531
  %533 = vrot.lane.b32.xlu0 %v448, 32
  %v534 = vpop.permute.xlu0 %533
  %v535 = vsel %vm147, %v522, 0
  %v537 = vsel %vm147, %v524, 0
  %v539 = vsel %vm147, %v526, 0
  %v541 = vsel %vm147, %v528, 0
  %v543 = vsel %vm147, %v530, 0
  %v545 = vsel %vm147, %v532, 0
  %v547 = vsel %vm147, %v534, 0
  %v549 = vsel %vm147, %v494, 0
  %551 = vmatpush.msra.mxu0 0.0
  %552 = vmatpush.msra.mxu0 0.0
  %553 = vmatpush.msra.mxu0 0.0
  %554 = vmatpush.msra.mxu0 0.0
  %555 = vmatpush.msra.mxu0 0.0
  %556 = vmatpush.msra.mxu0 0.0
  %557 = vmatpush.msra.mxu0 0.0
  %558 = vmatpush.msra.mxu0 0.0
  %559 = vmatpush.msra.mxu0 0.0
  %560 = vmatpush.msra.mxu0 0.0
  %561 = vmatpush.msra.mxu0 0.0
  %562 = vmatpush.msra.mxu0 0.0
  %563 = vmatpush.msra.mxu0 %v505
  %564 = vmatpush.msra.mxu0 %v504
  %565 = vmatpush.msra.mxu0 %v503
  %566 = vmatpush.msra.mxu0 %v502
  %567 = vmatmul.f32.gmra.mxu0 %v535
  %v568 = vpop.f32.mrf.mxu0
  %v569 = vadd.f32 %v512, %v568
  %570 = vmatmul.f32.gmra.mxu0 %v537
  %v571 = vpop.f32.mrf.mxu0
  %v572 = vadd.f32 %v512, %v571
  %573 = vmatmul.f32.gmra.mxu0 %v539
  %v574 = vpop.f32.mrf.mxu0
  %v575 = vadd.f32 %v512, %v574
  %576 = vmatmul.f32.gmra.mxu0 %v541
  %v577 = vpop.f32.mrf.mxu0
  %v578 = vadd.f32 %v512, %v577
  %579 = vmatmul.f32.gmra.mxu0 %v543
  %v580 = vpop.f32.mrf.mxu0
  %v581 = vadd.f32 %v512, %v580
  %582 = vmatmul.f32.gmra.mxu0 %v545
  %v583 = vpop.f32.mrf.mxu0
  %v584 = vadd.f32 %v512, %v583
  %585 = vmatmul.f32.gmra.mxu0 %v547
  %v586 = vpop.f32.mrf.mxu0
  %v587 = vadd.f32 %v512, %v586
  %588 = vmatmul.f32.gmra.mxu0 %v549
  %v589 = vpop.f32.mrf.mxu0
  %v590 = vadd.f32 %v512, %v589
  %591 = vdwg.mxu0
  %s592 = scalar_lea.vmem %s1, 8
  %v593 = vld [vmem:[%s592] sm:$0xff]
  %s594 = scalar_lea.vmem %s2, 8
  %v595 = vld [vmem:[%s594] sm:$0xff]
  %v596 = vpack.c.bf16 %v593, %v593
  %v601 = vunpack.c.l.b16 %v506
  %v602 = vunpack.c.l.b16 %v507
  %v603 = vunpack.c.l.b16 %v508
  %v604 = vunpack.c.l.b16 %v509
  %v605 = vpack.c.b16 %v602, %v601
  %v606 = vpack.c.b16 %v604, %v603
  %v610 = vsel %vm147, %v596, 0
  %612 = vmatpush.bf16.msra.mxu0 0
  %613 = vmatpush.bf16.msra.mxu0 0
  %614 = vmatpush.bf16.msra.mxu0 0
  %615 = vmatpush.bf16.msra.mxu0 0
  %616 = vmatpush.bf16.msra.mxu0 0
  %617 = vmatpush.bf16.msra.mxu0 0
  %618 = vmatpush.bf16.msra.mxu0 %v606
  %619 = vmatpush.bf16.msra.mxu0 %v605
  %620 = vmatmul.bf16.gmra.mxu0 %v610
  %v621 = vpop.f32.mrf.mxu0
  %v622 = vadd.f32 0.0, %v621
  %v623 = vpop.f32.mrf.mxu0
  %624 = vdwg.mxu0
  %v625 = vadd.f32 %v569, %v622
  %v626 = vmul.f32 %v625, %v47
  %v627 = vtanh.pop %v626
  %v628 = vmul.f32 %v627, 0.5
  %v629 = vadd.f32 %v628, 0.5
  %v630 = vsel %vm46, %v627, %v629
  %632 = vrot.lane.b32.xlu0 %v595, 32
  %v633 = vpop.permute.xlu0 %632
  %v635 = vmul.f32 %v630, %v633
  %637 = vrot.lane.b32.xlu0 %v630, 64
  %v638 = vpop.permute.xlu0 %637
  %v640 = vmul.f32 %v630, %v638
  %642 = vrot.lane.b32.xlu0 %v640, 32
  %v643 = vpop.permute.xlu0 %642
  %v645 = vadd.f32 %v635, %v643
  %v646 = vtanh.pop %v645
  %648 = vrot.lane.b32.xlu0 %v646, 64
  %v649 = vpop.permute.xlu0 %648
  %v651 = vmul.f32 %v630, %v649
  %v652 = vpack.c.bf16 %v651, %v651
  %654 = vrot.lane.b32.xlu0 %v652, 32
  %v655 = vpop.permute.xlu0 %654
  %v657 = vsel %vm147, %v655, 0
  %659 = vmatpush.bf16.msra.mxu0 0
  %660 = vmatpush.bf16.msra.mxu0 0
  %661 = vmatpush.bf16.msra.mxu0 0
  %662 = vmatpush.bf16.msra.mxu0 0
  %663 = vmatpush.bf16.msra.mxu0 0
  %664 = vmatpush.bf16.msra.mxu0 0
  %665 = vmatpush.bf16.msra.mxu0 %v606
  %666 = vmatpush.bf16.msra.mxu0 %v605
  %667 = vmatmul.bf16.gmra.mxu0 %v657
  %v668 = vpop.f32.mrf.mxu0
  %v669 = vadd.f32 0.0, %v668
  %v670 = vpop.f32.mrf.mxu0
  %671 = vdwg.mxu0
  %v672 = vadd.f32 %v572, %v669
  %v673 = vmul.f32 %v672, %v47
  %v674 = vtanh.pop %v673
  %v675 = vmul.f32 %v674, 0.5
  %v676 = vadd.f32 %v675, 0.5
  %v677 = vsel %vm46, %v674, %v676
  %v678 = vmul.f32 %v677, %v645
  %680 = vrot.lane.b32.xlu0 %v677, 64
  %v681 = vpop.permute.xlu0 %680
  %v683 = vmul.f32 %v677, %v681
  %685 = vrot.lane.b32.xlu0 %v683, 32
  %v686 = vpop.permute.xlu0 %685
  %v688 = vadd.f32 %v678, %v686
  %v689 = vtanh.pop %v688
  %691 = vrot.lane.b32.xlu0 %v689, 64
  %v692 = vpop.permute.xlu0 %691
  %v694 = vmul.f32 %v677, %v692
  %v695 = vpack.c.bf16 %v694, %v694
  %697 = vrot.lane.b32.xlu0 %v695, 32
  %v698 = vpop.permute.xlu0 %697
  %v700 = vsel %vm147, %v698, 0
  %702 = vmatpush.bf16.msra.mxu0 0
  %703 = vmatpush.bf16.msra.mxu0 0
  %704 = vmatpush.bf16.msra.mxu0 0
  %705 = vmatpush.bf16.msra.mxu0 0
  %706 = vmatpush.bf16.msra.mxu0 0
  %707 = vmatpush.bf16.msra.mxu0 0
  %708 = vmatpush.bf16.msra.mxu0 %v606
  %709 = vmatpush.bf16.msra.mxu0 %v605
  %710 = vmatmul.bf16.gmra.mxu0 %v700
  %v711 = vpop.f32.mrf.mxu0
  %v712 = vadd.f32 0.0, %v711
  %v713 = vpop.f32.mrf.mxu0
  %714 = vdwg.mxu0
  %v715 = vadd.f32 %v575, %v712
  %v716 = vmul.f32 %v715, %v47
  %v717 = vtanh.pop %v716
  %v718 = vmul.f32 %v717, 0.5
  %v719 = vadd.f32 %v718, 0.5
  %v720 = vsel %vm46, %v717, %v719
  %v721 = vmul.f32 %v720, %v688
  %723 = vrot.lane.b32.xlu0 %v720, 64
  %v724 = vpop.permute.xlu0 %723
  %v726 = vmul.f32 %v720, %v724
  %728 = vrot.lane.b32.xlu0 %v726, 32
  %v729 = vpop.permute.xlu0 %728
  %v731 = vadd.f32 %v721, %v729
  %v732 = vtanh.pop %v731
  %734 = vrot.lane.b32.xlu0 %v732, 64
  %v735 = vpop.permute.xlu0 %734
  %v737 = vmul.f32 %v720, %v735
  %v738 = vpack.c.bf16 %v737, %v737
  %740 = vrot.lane.b32.xlu0 %v738, 32
  %v741 = vpop.permute.xlu0 %740
  %v743 = vsel %vm147, %v741, 0
  %745 = vmatpush.bf16.msra.mxu0 0
  %746 = vmatpush.bf16.msra.mxu0 0
  %747 = vmatpush.bf16.msra.mxu0 0
  %748 = vmatpush.bf16.msra.mxu0 0
  %749 = vmatpush.bf16.msra.mxu0 0
  %750 = vmatpush.bf16.msra.mxu0 0
  %751 = vmatpush.bf16.msra.mxu0 %v606
  %752 = vmatpush.bf16.msra.mxu0 %v605
  %753 = vmatmul.bf16.gmra.mxu0 %v743
  %v754 = vpop.f32.mrf.mxu0
  %v755 = vadd.f32 0.0, %v754
  %v756 = vpop.f32.mrf.mxu0
  %757 = vdwg.mxu0
  %v758 = vadd.f32 %v578, %v755
  %v759 = vmul.f32 %v758, %v47
  %v760 = vtanh.pop %v759
  %v761 = vmul.f32 %v760, 0.5
  %v762 = vadd.f32 %v761, 0.5
  %v763 = vsel %vm46, %v760, %v762
  %v764 = vmul.f32 %v763, %v731
  %766 = vrot.lane.b32.xlu0 %v763, 64
  %v767 = vpop.permute.xlu0 %766
  %v769 = vmul.f32 %v763, %v767
  %771 = vrot.lane.b32.xlu0 %v769, 32
  %v772 = vpop.permute.xlu0 %771
  %v774 = vadd.f32 %v764, %v772
  %v775 = vtanh.pop %v774
  %777 = vrot.lane.b32.xlu0 %v775, 64
  %v778 = vpop.permute.xlu0 %777
  %v780 = vmul.f32 %v763, %v778
  %v781 = vpack.c.bf16 %v780, %v780
  %783 = vrot.lane.b32.xlu0 %v781, 32
  %v784 = vpop.permute.xlu0 %783
  %v786 = vsel %vm147, %v784, 0
  %788 = vmatpush.bf16.msra.mxu0 0
  %789 = vmatpush.bf16.msra.mxu0 0
  %790 = vmatpush.bf16.msra.mxu0 0
  %791 = vmatpush.bf16.msra.mxu0 0
  %792 = vmatpush.bf16.msra.mxu0 0
  %793 = vmatpush.bf16.msra.mxu0 0
  %794 = vmatpush.bf16.msra.mxu0 %v606
  %795 = vmatpush.bf16.msra.mxu0 %v605
  %796 = vmatmul.bf16.gmra.mxu0 %v786
  %v797 = vpop.f32.mrf.mxu0
  %v798 = vadd.f32 0.0, %v797
  %v799 = vpop.f32.mrf.mxu0
  %800 = vdwg.mxu0
  %v801 = vadd.f32 %v581, %v798
  %v802 = vmul.f32 %v801, %v47
  %v803 = vtanh.pop %v802
  %v804 = vmul.f32 %v803, 0.5
  %v805 = vadd.f32 %v804, 0.5
  %v806 = vsel %vm46, %v803, %v805
  %v807 = vmul.f32 %v806, %v774
  %809 = vrot.lane.b32.xlu0 %v806, 64
  %v810 = vpop.permute.xlu0 %809
  %v812 = vmul.f32 %v806, %v810
  %814 = vrot.lane.b32.xlu0 %v812, 32
  %v815 = vpop.permute.xlu0 %814
  %v817 = vadd.f32 %v807, %v815
  %v818 = vtanh.pop %v817
  %820 = vrot.lane.b32.xlu0 %v818, 64
  %v821 = vpop.permute.xlu0 %820
  %v823 = vmul.f32 %v806, %v821
  %v824 = vpack.c.bf16 %v823, %v823
  %826 = vrot.lane.b32.xlu0 %v824, 32
  %v827 = vpop.permute.xlu0 %826
  %v829 = vsel %vm147, %v827, 0
  %831 = vmatpush.bf16.msra.mxu0 0
  %832 = vmatpush.bf16.msra.mxu0 0
  %833 = vmatpush.bf16.msra.mxu0 0
  %834 = vmatpush.bf16.msra.mxu0 0
  %835 = vmatpush.bf16.msra.mxu0 0
  %836 = vmatpush.bf16.msra.mxu0 0
  %837 = vmatpush.bf16.msra.mxu0 %v606
  %838 = vmatpush.bf16.msra.mxu0 %v605
  %839 = vmatmul.bf16.gmra.mxu0 %v829
  %v840 = vpop.f32.mrf.mxu0
  %v841 = vadd.f32 0.0, %v840
  %v842 = vpop.f32.mrf.mxu0
  %843 = vdwg.mxu0
  %v844 = vadd.f32 %v584, %v841
  %v845 = vmul.f32 %v844, %v47
  %v846 = vtanh.pop %v845
  %v847 = vmul.f32 %v846, 0.5
  %v848 = vadd.f32 %v847, 0.5
  %v849 = vsel %vm46, %v846, %v848
  %v850 = vmul.f32 %v849, %v817
  %852 = vrot.lane.b32.xlu0 %v849, 64
  %v853 = vpop.permute.xlu0 %852
  %v855 = vmul.f32 %v849, %v853
  %857 = vrot.lane.b32.xlu0 %v855, 32
  %v858 = vpop.permute.xlu0 %857
  %v860 = vadd.f32 %v850, %v858
  %v861 = vtanh.pop %v860
  %863 = vrot.lane.b32.xlu0 %v861, 64
  %v864 = vpop.permute.xlu0 %863
  %v866 = vmul.f32 %v849, %v864
  %v867 = vpack.c.bf16 %v866, %v866
  %869 = vrot.lane.b32.xlu0 %v867, 32
  %v870 = vpop.permute.xlu0 %869
  %v872 = vsel %vm147, %v870, 0
  %874 = vmatpush.bf16.msra.mxu0 0
  %875 = vmatpush.bf16.msra.mxu0 0
  %876 = vmatpush.bf16.msra.mxu0 0
  %877 = vmatpush.bf16.msra.mxu0 0
  %878 = vmatpush.bf16.msra.mxu0 0
  %879 = vmatpush.bf16.msra.mxu0 0
  %880 = vmatpush.bf16.msra.mxu0 %v606
  %881 = vmatpush.bf16.msra.mxu0 %v605
  %882 = vmatmul.bf16.gmra.mxu0 %v872
  %v883 = vpop.f32.mrf.mxu0
  %v884 = vadd.f32 0.0, %v883
  %v885 = vpop.f32.mrf.mxu0
  %886 = vdwg.mxu0
  %v887 = vadd.f32 %v587, %v884
  %v888 = vmul.f32 %v887, %v47
  %v889 = vtanh.pop %v888
  %v890 = vmul.f32 %v889, 0.5
  %v891 = vadd.f32 %v890, 0.5
  %v892 = vsel %vm46, %v889, %v891
  %v893 = vmul.f32 %v892, %v860
  %895 = vrot.lane.b32.xlu0 %v892, 64
  %v896 = vpop.permute.xlu0 %895
  %v898 = vmul.f32 %v892, %v896
  %900 = vrot.lane.b32.xlu0 %v898, 32
  %v901 = vpop.permute.xlu0 %900
  %v903 = vadd.f32 %v893, %v901
  %v904 = vtanh.pop %v903
  %906 = vrot.lane.b32.xlu0 %v904, 64
  %v907 = vpop.permute.xlu0 %906
  %v909 = vmul.f32 %v892, %v907
  %v910 = vpack.c.bf16 %v909, %v909
  %912 = vrot.lane.b32.xlu0 %v910, 32
  %v913 = vpop.permute.xlu0 %912
  %v915 = vsel %vm147, %v913, 0
  %917 = vmatpush.bf16.msra.mxu0 0
  %918 = vmatpush.bf16.msra.mxu0 0
  %919 = vmatpush.bf16.msra.mxu0 0
  %920 = vmatpush.bf16.msra.mxu0 0
  %921 = vmatpush.bf16.msra.mxu0 0
  %922 = vmatpush.bf16.msra.mxu0 0
  %923 = vmatpush.bf16.msra.mxu0 %v606
  %924 = vmatpush.bf16.msra.mxu0 %v605
  %925 = vmatmul.bf16.gmra.mxu0 %v915
  %v926 = vpop.f32.mrf.mxu0
  %v927 = vadd.f32 0.0, %v926
  %v928 = vpop.f32.mrf.mxu0
  %929 = vdwg.mxu0
  %v930 = vadd.f32 %v590, %v927
  %v931 = vmul.f32 %v930, %v47
  %v932 = vtanh.pop %v931
  %v933 = vmul.f32 %v932, 0.5
  %v934 = vadd.f32 %v933, 0.5
  %v935 = vsel %vm46, %v932, %v934
  %v936 = vmul.f32 %v935, %v903
  %938 = vrot.lane.b32.xlu0 %v935, 64
  %v939 = vpop.permute.xlu0 %938
  %v941 = vmul.f32 %v935, %v939
  %943 = vrot.lane.b32.xlu0 %v941, 32
  %v944 = vpop.permute.xlu0 %943
  %v946 = vadd.f32 %v936, %v944
  %v947 = vtanh.pop %v946
  %949 = vrot.lane.b32.xlu0 %v947, 64
  %v950 = vpop.permute.xlu0 %949
  %v952 = vmul.f32 %v935, %v950
  %954 = vrot.lane.b32.xlu0 %v952, 32
  %v955 = vpop.permute.xlu0 %954
  %s957 = scalar_lea.vmem %s12, 8
  %958 = vst.msk [vmem:[%s957] sm:$0xff] %vm147, %v955
  %960 = vrot.lane.b32.xlu0 %v946, 96
  %v961 = vpop.permute.xlu0 %960
  %s963 = scalar_lea.vmem %s13, 8
  %964 = vst.msk [vmem:[%s963] sm:$0xff] %vm147, %v961
  %v965 = vld [vmem:[%s9] sm:$0xff]
  %v966 = vld [vmem:[%s9 + $0x8] sm:$0xff]
  %v967 = vld [vmem:[%s9 + $0x10] sm:$0xff]
  %v968 = vld [vmem:[%s9 + $0x18] sm:$0xff]
  %v969 = vld [vmem:[%s10] sm:$0x1]
  %v971 = vperm.slane %v969, 0
  %v973 = vsel %vm147, %v955, 0
  %975 = vmatpush.msra.mxu0 0.0
  %976 = vmatpush.msra.mxu0 0.0
  %977 = vmatpush.msra.mxu0 0.0
  %978 = vmatpush.msra.mxu0 0.0
  %979 = vmatpush.msra.mxu0 0.0
  %980 = vmatpush.msra.mxu0 0.0
  %981 = vmatpush.msra.mxu0 0.0
  %982 = vmatpush.msra.mxu0 0.0
  %983 = vmatpush.msra.mxu0 0.0
  %984 = vmatpush.msra.mxu0 0.0
  %985 = vmatpush.msra.mxu0 0.0
  %986 = vmatpush.msra.mxu0 0.0
  %987 = vmatpush.msra.mxu0 %v968
  %988 = vmatpush.msra.mxu0 %v967
  %989 = vmatpush.msra.mxu0 %v966
  %990 = vmatpush.msra.mxu0 %v965
  %991 = vmatmul.f32.gmra.mxu0 %v973
  %v992 = vpop.f32.mrf.mxu0
  %v993 = vadd.f32 %v971, %v992
  %994 = vdwg.mxu0
  %vm995 = vcmp.ge.f32.partialorder %v993, 0.0
  %v996 = vmul.f32 %v993, 0.01
  %v997 = vsel %vm995, %v993, %v996
  %vm998 = vcmask 31744
  %999 = vst.msk [vmem:[%s11] sm:$0xff] %vm998, %v997
  // Predicated region
  $region46: #{lstm_net_forward.1} parent=0 // pred_check
    _
  $region47: #{lstm_net_forward.1} parent=0 // pred_check_branch
    %1001 = sbr.rel (0) target = $region49
  $region48: #{lstm_net_forward.1} parent=0 // pred_region
    _
  $region49: #{lstm_net_forward.1} parent=0 // pred_fallthru
    _
  // Predicated region
  $region50: #{lstm_net_forward.1} parent=0 // pred_check
    _
  $region51: #{lstm_net_forward.1} parent=0 // pred_check_branch
    %1003 = sbr.rel (0) target = $region53
  $region52: #{lstm_net_forward.1} parent=0 // pred_region
    _
  $region53: #{lstm_net_forward.1} parent=0 // pred_fallthru
    _
  // Predicated region
  $region54: #{lstm_net_forward.1} parent=0 // pred_check
    _
  $region55: #{lstm_net_forward.1} parent=0 // pred_check_branch
    %1005 = sbr.rel (0) target = $region57
  $region56: #{lstm_net_forward.1} parent=0 // pred_region
    _
  $region57: #{lstm_net_forward.1} parent=0 // pred_fallthru
    _
  // Predicated region
  $region58: #{lstm_net_forward.1} parent=0 // pred_check
    _
  $region59: #{lstm_net_forward.1} parent=0 // pred_check_branch
    %1007 = sbr.rel (0) target = $region61
  $region60: #{lstm_net_forward.1} parent=0 // pred_region
    _
  $region61: #{lstm_net_forward.1} parent=0 // pred_fallthru
    _
  // Predicated region
  $region62: #{lstm_net_forward.1} parent=0 // pred_check
    _
  $region63: #{lstm_net_forward.1} parent=0 // pred_check_branch
    %1009 = sbr.rel (0) target = $region65
  $region64: #{lstm_net_forward.1} parent=0 // pred_region
    _
  $region65: #{lstm_net_forward.1} parent=0 // pred_fallthru
    _
  // Predicated region
  $region66: #{lstm_net_forward.1} parent=0 // pred_check
    _
  $region67: #{lstm_net_forward.1} parent=0 // pred_check_branch
    %1011 = sbr.rel (0) target = $region69
  $region68: #{lstm_net_forward.1} parent=0 // pred_region
    _
  $region69: #{lstm_net_forward.1} parent=0 // pred_fallthru
    _

</llo_original>
